<compile_context>
chip_gen: v7x
topology: tpu7x:2x2x1
jax: 0.10.0
libtpu: 0.0.40
codegen_flags: <defaults>
</compile_context>

<pallas_src>
import functools

import jax
import jax.numpy as jnp
from jax import lax
from jax.experimental import pallas as pl
from jax.experimental.pallas import tpu as pltpu

EPS = 1e-8


# ----------------------------------------------------------------------------
# Pallas kernels
# ----------------------------------------------------------------------------

# Fused bidirectional LSTM layer.  The input projection x @ W_ih^T + b is
# precomputed in the wrapper as ONE large matmul, so the recurrence only does
# h @ W_hh^T per direction per timestep.  Variable lengths are handled by
# masking (equivalent to pack_padded_sequence: padded outputs are 0 and the
# final h is that of the last valid timestep).
def _bilstm_kernel(gxf_ref, gxb_ref, len_ref, whhf_ref, whhb_ref,
                   outf_ref, outb_ref, hnf_ref, hnb_ref,
                   hf_sc, cf_sc, hb_sc, cb_sc, *, T, H):
    hf_sc[...] = jnp.zeros_like(hf_sc)
    cf_sc[...] = jnp.zeros_like(cf_sc)
    hb_sc[...] = jnp.zeros_like(hb_sc)
    cb_sc[...] = jnp.zeros_like(cb_sc)
    whh_f = whhf_ref[...]            # (H, 4H), pre-transposed in the wrapper
    whh_b = whhb_ref[...]            # (H, 4H)
    lens = len_ref[...]              # (B, 1) int32

    def gate(gates, h_prev, c_prev, mask):
        i_g = jax.nn.sigmoid(gates[:, 0 * H:1 * H])
        f_g = jax.nn.sigmoid(gates[:, 1 * H:2 * H])
        g_g = jnp.tanh(gates[:, 2 * H:3 * H])
        o_g = jax.nn.sigmoid(gates[:, 3 * H:4 * H])
        c_new = f_g * c_prev + i_g * g_g
        h_new = o_g * jnp.tanh(c_new)
        h_upd = jnp.where(mask, h_new, h_prev)
        c_upd = jnp.where(mask, c_new, c_prev)
        out = jnp.where(mask, h_new, jnp.zeros_like(h_new))
        return h_upd, c_upd, out

    def step(i, carry):
        tf = i
        tb = T - 1 - i
        # forward direction (time tf)
        g_f = gxf_ref[tf] + jnp.dot(hf_sc[...], whh_f,
                                    preferred_element_type=jnp.float32)
        hf, cf, of = gate(g_f, hf_sc[...], cf_sc[...], tf < lens)
        hf_sc[...] = hf
        cf_sc[...] = cf
        outf_ref[tf] = of
        # backward direction (time tb)
        g_b = gxb_ref[tb] + jnp.dot(hb_sc[...], whh_b,
                                    preferred_element_type=jnp.float32)
        hb, cb, ob = gate(g_b, hb_sc[...], cb_sc[...], tb < lens)
        hb_sc[...] = hb
        cb_sc[...] = cb
        outb_ref[tb] = ob
        return carry

    lax.fori_loop(0, T, step, 0, unroll=True)
    hnf_ref[...] = hf_sc[...]
    hnb_ref[...] = hb_sc[...]


def lstm_bidir_layer(x, lengths, pf, pb):
    """x (B, T, D); pf/pb = (w_ih (4H,D), w_hh (4H,H), b (4H,)).
    Returns (out (B, T, 2H), h_n_fwd (B, H), h_n_bwd (B, H))."""
    B, T, D = x.shape
    H = pf[1].shape[1]
    x_tm = jnp.transpose(x.astype(jnp.float32), (1, 0, 2)).reshape(T * B, D)
    # one big MXU matmul for both directions' input projections
    w_ih = jnp.concatenate([pf[0], pb[0]], axis=0).astype(jnp.float32)  # (8H, D)
    bias = jnp.concatenate([pf[2], pb[2]], axis=0).astype(jnp.float32)  # (8H,)
    gx = (x_tm @ w_ih.T + bias).reshape(T, B, 8 * H)
    gxf = gx[:, :, :4 * H]
    gxb = gx[:, :, 4 * H:]
    lens = lengths.reshape(B, 1).astype(jnp.int32)
    vmem = pl.BlockSpec(memory_space=pltpu.MemorySpace.VMEM)
    out_f, out_b, hn_f, hn_b = pl.pallas_call(
        functools.partial(_bilstm_kernel, T=T, H=H),
        out_shape=(jax.ShapeDtypeStruct((T, B, H), jnp.float32),
                   jax.ShapeDtypeStruct((T, B, H), jnp.float32),
                   jax.ShapeDtypeStruct((B, H), jnp.float32),
                   jax.ShapeDtypeStruct((B, H), jnp.float32)),
        in_specs=[vmem] * 5,
        out_specs=(vmem, vmem, vmem, vmem),
        scratch_shapes=[pltpu.VMEM((B, H), jnp.float32)] * 4,
    )(gxf, gxb, lens,
      pf[1].T.astype(jnp.float32), pb[1].T.astype(jnp.float32))
    out = jnp.transpose(jnp.concatenate([out_f, out_b], axis=-1), (1, 0, 2))
    return out, hn_f, hn_b


def bilstm(x, lengths, layer_params):
    """Multi-layer bidirectional LSTM (one fused pallas_call per layer).
    Returns last-layer outputs and a list of per-layer (h_n_fwd, h_n_bwd)."""
    inp = x
    finals = []
    for (pf, pb) in layer_params:
        inp, hf, hb = lstm_bidir_layer(inp, lengths, pf, pb)
        finals.append((hf, hb))
    return inp, finals


# Fused multi-perspective weighted-cosine matching: K (v1, v2, w) triples are
# packed along lanes; the three reductions become MXU matmuls against a
# block-diagonal squared-weight matrix.  Output is a lane-dense (N, K*L) slab.
def _mp_match_fused_kernel(v1_ref, v2_ref, wbd_ref, out_ref):
    v1 = v1_ref[...]
    v2 = v2_ref[...]
    wbd = wbd_ref[...]
    num = jnp.dot(v1 * v2, wbd, preferred_element_type=jnp.float32)
    n1 = jnp.dot(v1 * v1, wbd, preferred_element_type=jnp.float32)
    n2 = jnp.dot(v2 * v2, wbd, preferred_element_type=jnp.float32)
    den = jnp.maximum(jnp.sqrt(jnp.maximum(n1, 0.0)) *
                      jnp.sqrt(jnp.maximum(n2, 0.0)), EPS)
    out_ref[...] = num / den


def _block_diag(mats):
    rows = sum(m.shape[0] for m in mats)
    cols = sum(m.shape[1] for m in mats)
    out = jnp.zeros((rows, cols), mats[0].dtype)
    r = c = 0
    for m in mats:
        out = out.at[r:r + m.shape[0], c:c + m.shape[1]].set(m)
        r += m.shape[0]
        c += m.shape[1]
    return out


def mp_match_fused(v1_list, v2_list, w_list):
    """K matchings in one kernel.  v1/v2: K tensors (B,S,H); w: K of (L,H).
    Returns a list of K (B,S,L) cosine-matching tensors."""
    K = len(v1_list)
    B, S, H = v1_list[0].shape
    L = w_list[0].shape[0]
    v1 = jnp.concatenate(
        [v.reshape(B * S, H).astype(jnp.float32) for v in v1_list], axis=-1)
    v2 = jnp.concatenate(
        [v.reshape(B * S, H).astype(jnp.float32) for v in v2_list], axis=-1)
    wbd = _block_diag([(w * w).T.astype(jnp.float32) for w in w_list])
    vmem = pl.BlockSpec(memory_space=pltpu.MemorySpace.VMEM)
    out = pl.pallas_call(
        _mp_match_fused_kernel,
        out_shape=jax.ShapeDtypeStruct((B * S, K * L), jnp.float32),
        in_specs=[vmem] * 3,
        out_specs=vmem,
    )(v1, v2, wbd)
    return [out[:, k * L:(k + 1) * L].reshape(B, S, L) for k in range(K)]


# Prediction head: tanh(x @ W1^T + b1) @ W2^T + b2 (weights pre-transposed).
def _mlp_kernel(x_ref, w1t_ref, b1_ref, w2t_ref, b2_ref, o_ref):
    hdn = jnp.tanh(jnp.dot(x_ref[...], w1t_ref[...],
                           preferred_element_type=jnp.float32) + b1_ref[...])
    o_ref[...] = jnp.dot(hdn, w2t_ref[...],
                         preferred_element_type=jnp.float32) + b2_ref[...]


def mlp_head(x, w1, b1, w2, b2):
    vmem = pl.BlockSpec(memory_space=pltpu.MemorySpace.VMEM)
    return pl.pallas_call(
        _mlp_kernel,
        out_shape=jax.ShapeDtypeStruct((x.shape[0], w2.shape[0]), jnp.float32),
        in_specs=[vmem] * 5,
        out_specs=vmem,
    )(x.astype(jnp.float32),
      w1.T.astype(jnp.float32), b1.reshape(1, -1).astype(jnp.float32),
      w2.T.astype(jnp.float32), b2.reshape(1, -1).astype(jnp.float32))


# ----------------------------------------------------------------------------
# Model glue (plain JAX)
# ----------------------------------------------------------------------------

def _div_safe(n, d):
    return n / jnp.where(d > EPS, d, EPS)


def pad_time(x, s_max):
    B, S, D = x.shape
    if S == s_max:
        return x
    return jnp.concatenate([x, jnp.zeros((B, s_max - S, D), x.dtype)], axis=1)


def char_repr_both(char_p, char_p_len, char_h, char_h_len, char_emb, char_params):
    """One fused char-LSTM pass over the words of BOTH sentences."""
    B, Sp, W = char_p.shape
    Sh = char_h.shape[1]
    ids = jnp.concatenate([char_p.reshape(B * Sp, W),
                           char_h.reshape(B * Sh, W)], axis=0)
    lens = jnp.concatenate([char_p_len.reshape(-1),
                            char_h_len.reshape(-1)], axis=0)
    emb = char_emb[ids]                          # (N, W, char_dim)
    _, finals = bilstm(emb, lens, char_params)
    hf, hb = finals[-1]
    rep = jnp.concatenate([hf, hb], axis=-1)     # (N, 2*char_lstm_dim)
    return (rep[:B * Sp].reshape(B, Sp, -1),
            rep[B * Sp:].reshape(B, Sh, -1))


def cosine_attention(v1, v2):
    """(B,S1,H),(B,S2,H) -> (B,S1,S2) plain cosine similarity."""
    a = jnp.einsum('bih,bjh->bij', v1, v2)
    n1 = jnp.sqrt(jnp.sum(v1 * v1, axis=-1, keepdims=True))
    n2 = jnp.sqrt(jnp.sum(v2 * v2, axis=-1, keepdims=True))
    return _div_safe(a, n1 * jnp.transpose(n2, (0, 2, 1)))


def pairwise_mp_cosine(v1, v2, w):
    """v1 (B,S1,H), v2 (B,S2,H), w (L,H) -> (B,S1,S2,L) weighted cosine
    (matmul form: numerator via einsum over w^2, norms via v^2 @ w^2)."""
    w2 = w * w
    num = jnp.einsum('bih,lh,bjh->bijl', v1, w2, v2)
    n1 = jnp.sqrt(jnp.maximum(jnp.einsum('bih,lh->bil', v1 * v1, w2), 0.0))
    n2 = jnp.sqrt(jnp.maximum(jnp.einsum('bjh,lh->bjl', v2 * v2, w2), 0.0))
    den = jnp.maximum(n1[:, :, None, :] * n2[:, None, :, :], EPS)
    return num / den


def matching_layer(con_p, con_h, p_last_fw, p_first_bw, h_last_fw, h_first_bw,
                   ws, hidden):
    w1, w2, w3, w4, w5, w6, w7, w8 = ws
    p_fw, p_bw = con_p[..., :hidden], con_p[..., hidden:]
    h_fw, h_bw = con_h[..., :hidden], con_h[..., hidden:]
    B, Sp, _ = p_fw.shape
    Sh = h_fw.shape[1]

    # 2. maxpool matching (pairwise cosine, then max over the other sequence)
    mm_fw = pairwise_mp_cosine(p_fw, h_fw, w3)       # (B,Sp,Sh,L)
    mm_bw = pairwise_mp_cosine(p_bw, h_bw, w4)
    mv_p_max_fw = mm_fw.max(axis=2)
    mv_p_max_bw = mm_bw.max(axis=2)
    mv_h_max_fw = mm_fw.max(axis=1)
    mv_h_max_bw = mm_bw.max(axis=1)

    # 3/4. attention statistics (matmul form for the means)
    att_fw = cosine_attention(p_fw, h_fw)            # (B,Sp,Sh)
    att_bw = cosine_attention(p_bw, h_bw)

    att_mean_h_fw = _div_safe(jnp.einsum('bij,bjh->bih', att_fw, h_fw),
                              att_fw.sum(axis=2, keepdims=True))
    att_mean_h_bw = _div_safe(jnp.einsum('bij,bjh->bih', att_bw, h_bw),
                              att_bw.sum(axis=2, keepdims=True))
    att_mean_p_fw = _div_safe(jnp.einsum('bij,bih->bjh', att_fw, p_fw),
                              att_fw.sum(axis=1)[:, :, None])
    att_mean_p_bw = _div_safe(jnp.einsum('bij,bih->bjh', att_bw, p_bw),
                              att_bw.sum(axis=1)[:, :, None])

    att_max_h_fw = (h_fw[:, None, :, :] * att_fw[..., None]).max(axis=2)
    att_max_h_bw = (h_bw[:, None, :, :] * att_bw[..., None]).max(axis=2)
    att_max_p_fw = (p_fw[:, :, None, :] * att_fw[..., None]).max(axis=1)
    att_max_p_bw = (p_bw[:, :, None, :] * att_bw[..., None]).max(axis=1)

    bc = lambda v, S: jnp.broadcast_to(v[:, None, :], (B, S, hidden))

    # 1/3/4. full / attentive / max-attentive matching: one fused kernel per side
    (mv_p_full_fw, mv_p_att_mean_fw, mv_p_att_max_fw,
     mv_p_full_bw, mv_p_att_mean_bw, mv_p_att_max_bw) = mp_match_fused(
        [p_fw, p_fw, p_fw, p_bw, p_bw, p_bw],
        [bc(h_last_fw, Sp), att_mean_h_fw, att_max_h_fw,
         bc(h_first_bw, Sp), att_mean_h_bw, att_max_h_bw],
        [w1, w5, w7, w2, w6, w8])
    (mv_h_full_fw, mv_h_att_mean_fw, mv_h_att_max_fw,
     mv_h_full_bw, mv_h_att_mean_bw, mv_h_att_max_bw) = mp_match_fused(
        [h_fw, h_fw, h_fw, h_bw, h_bw, h_bw],
        [bc(p_last_fw, Sh), att_mean_p_fw, att_max_p_fw,
         bc(p_first_bw, Sh), att_mean_p_bw, att_max_p_bw],
        [w1, w5, w7, w2, w6, w8])

    mv_p = jnp.concatenate(
        [mv_p_full_fw, mv_p_max_fw, mv_p_att_mean_fw, mv_p_att_max_fw,
         mv_p_full_bw, mv_p_max_bw, mv_p_att_mean_bw, mv_p_att_max_bw], axis=2)
    mv_h = jnp.concatenate(
        [mv_h_full_fw, mv_h_max_fw, mv_h_att_mean_fw, mv_h_att_max_fw,
         mv_h_full_bw, mv_h_max_bw, mv_h_att_mean_bw, mv_h_att_max_bw], axis=2)
    return mv_p, mv_h


def bimpm_forward(params, cfg, p, p_len, h, h_len,
                  char_p, char_p_len, char_h, char_h_len):
    hidden = cfg['context_lstm_dim']
    B, Sp = p.shape
    Sh = h.shape[1]
    s_max = max(Sp, Sh)

    # char representations: one fused char-LSTM pass over both sentences
    char_rep_p, char_rep_h = char_repr_both(
        char_p, char_p_len, char_h, char_h_len,
        params['char_emb'], params['char_lstm'])

    rep_p = jnp.concatenate([params['word_emb'][p], char_rep_p], axis=-1)
    rep_h = jnp.concatenate([params['word_emb'][h], char_rep_h], axis=-1)

    # context LSTM: premise + hypothesis batched together (2 pallas_calls)
    rep = jnp.concatenate([pad_time(rep_p, s_max), pad_time(rep_h, s_max)], axis=0)
    lens = jnp.concatenate([p_len, h_len], axis=0)
    con, ctx_finals = bilstm(rep, lens, params['context_lstm'])
    con_p = con[:B, :Sp]
    con_h = con[B:, :Sh]
    hn_f_last, hn_b_last = ctx_finals[-1]            # last layer (2B, hidden)
    p_last_fw, h_last_fw = hn_f_last[:B], hn_f_last[B:]   # last VALID fwd state
    p_first_bw, h_first_bw = hn_b_last[:B], hn_b_last[B:]  # bwd state at t=0

    mv_p, mv_h = matching_layer(con_p, con_h, p_last_fw, p_first_bw,
                                h_last_fw, h_first_bw, params['match_w'], hidden)

    # aggregation LSTM: premise + hypothesis batched together (2 pallas_calls)
    mv = jnp.concatenate([pad_time(mv_p, s_max), pad_time(mv_h, s_max)], axis=0)
    _, agg_finals = bilstm(mv, lens, params['agg_lstm'])
    parts = []
    for hf, hb in agg_finals:                        # [l0_fwd, l0_bwd, l1_fwd, l1_bwd]
        parts += [hf, hb]
    agg = jnp.concatenate(parts, axis=-1)            # (2B, 2*layers*A)
    x = jnp.concatenate([agg[:B], agg[B:]], axis=-1)  # (B, 4*layers*A)

    fc1_w, fc1_b = params['fc1']
    fc2_w, fc2_b = params['fc2']
    return mlp_head(x, fc1_w, fc1_b, fc2_w, fc2_b)


# ----------------------------------------------------------------------------
# Deterministic parameter init
# ----------------------------------------------------------------------------

def init_lstm_params(key, input_size, hidden, num_layers, scale=0.1):
    layers = []
    for l in range(num_layers):
        isz = input_size if l == 0 else 2 * hidden
        key, kf1, kf2, kb1, kb2 = jax.random.split(key, 5)
        pf = (scale * jax.random.normal(kf1, (4 * hidden, isz), jnp.float32),
              scale * jax.random.normal(kf2, (4 * hidden, hidden), jnp.float32),
              jnp.zeros((4 * hidden,), jnp.float32))
        pb = (scale * jax.random.normal(kb1, (4 * hidden, isz), jnp.float32),
              scale * jax.random.normal(kb2, (4 * hidden, hidden), jnp.float32),
              jnp.zeros((4 * hidden,), jnp.float32))
        layers.append((pf, pb))
    return key, layers


if __name__ == "__main__":
    key = jax.random.PRNGKey(0)

    # small config consistent with the module's constructor
    class_size = 3
    word_vocab_size, char_vocab_size = 50, 30
    word_dim, char_dim, char_lstm_dim = 32, 8, 8
    context_lstm_dim, context_layer_num = 16, 2
    aggregation_lstm_dim, aggregation_layer_num = 16, 2
    num_perspective = 4
    num_matching = 8
    B, Sp, Sh, W = 2, 6, 5, 4
    word_rep_dim = word_dim + 2 * char_lstm_dim

    cfg = dict(context_lstm_dim=context_lstm_dim, char_lstm_dim=char_lstm_dim)

    # embeddings (uniform(-0.005, 0.005), padding row 1 zeroed)
    key, kw, kc = jax.random.split(key, 3)
    word_emb = jax.random.uniform(kw, (word_vocab_size, word_dim), jnp.float32,
                                  -0.005, 0.005).at[1].set(0.0)
    char_emb = jax.random.uniform(kc, (char_vocab_size, char_dim), jnp.float32,
                                  -0.005, 0.005).at[1].set(0.0)

    key, char_lstm = init_lstm_params(key, char_dim, char_lstm_dim, 1)
    key, ctx_lstm = init_lstm_params(key, word_rep_dim, context_lstm_dim,
                                     context_layer_num)
    key, agg_lstm = init_lstm_params(key, num_perspective * num_matching,
                                     aggregation_lstm_dim, aggregation_layer_num)

    key, *mk = jax.random.split(key, 9)
    match_w = tuple(0.1 * jax.random.normal(k, (num_perspective, context_lstm_dim),
                                            jnp.float32) for k in mk)

    fc1_in = aggregation_lstm_dim * 4 * aggregation_layer_num      # 128
    fc1_out = aggregation_lstm_dim * 2 * aggregation_layer_num     # 64
    key, k1, k2 = jax.random.split(key, 3)
    fc1_w = jax.random.uniform(k1, (fc1_out, fc1_in), jnp.float32, -0.005, 0.005)
    fc1_b = jnp.zeros((fc1_out,), jnp.float32)
    fc2_w = jax.random.uniform(k2, (class_size, fc1_out), jnp.float32, -0.005, 0.005)
    fc2_b = jnp.zeros((class_size,), jnp.float32)

    params = dict(word_emb=word_emb, char_emb=char_emb,
                  char_lstm=char_lstm, context_lstm=ctx_lstm, agg_lstm=agg_lstm,
                  match_w=match_w, fc1=(fc1_w, fc1_b), fc2=(fc2_w, fc2_b))

    # deterministic example inputs
    key, kp, kh, kcp, kch, kcpl, kchl = jax.random.split(key, 7)
    p = jax.random.randint(kp, (B, Sp), 2, word_vocab_size)
    h = jax.random.randint(kh, (B, Sh), 2, word_vocab_size)
    char_p = jax.random.randint(kcp, (B, Sp, W), 2, char_vocab_size)
    char_h = jax.random.randint(kch, (B, Sh, W), 2, char_vocab_size)
    p_len = jnp.array([Sp, Sp - 2], jnp.int32)
    h_len = jnp.array([Sh, Sh - 2], jnp.int32)
    char_p_len = jax.random.randint(kcpl, (B, Sp), 1, W + 1)
    char_h_len = jax.random.randint(kchl, (B, Sh), 1, W + 1)

    logits = bimpm_forward(params, cfg, p, p_len, h, h_len,
                           char_p, char_p_len, char_h, char_h_len)
    logits = jax.block_until_ready(logits)
    assert logits.shape == (B, class_size), logits.shape
    assert bool(jnp.all(jnp.isfinite(logits)))
    print("KERNEL_OK")
</pallas_src>

<mosaic_0001>
module attributes {stable_mosaic.version = 11 : i64} {
  func.func @_bilstm_kernel(%arg0: memref<4x22x32xf32, #tpu.memory_space<vmem>>, %arg1: memref<4x22x32xf32, #tpu.memory_space<vmem>>, %arg2: memref<22x1xi32, #tpu.memory_space<vmem>>, %arg3: memref<8x32xf32, #tpu.memory_space<vmem>>, %arg4: memref<8x32xf32, #tpu.memory_space<vmem>>, %arg5: memref<4x22x8xf32, #tpu.memory_space<vmem>>, %arg6: memref<4x22x8xf32, #tpu.memory_space<vmem>>, %arg7: memref<22x8xf32, #tpu.memory_space<vmem>>, %arg8: memref<22x8xf32, #tpu.memory_space<vmem>>, %arg9: memref<22x8xf32, #tpu.memory_space<vmem>>, %arg10: memref<22x8xf32, #tpu.memory_space<vmem>>, %arg11: memref<22x8xf32, #tpu.memory_space<vmem>>, %arg12: memref<22x8xf32, #tpu.memory_space<vmem>>) attributes {dimension_semantics = [], scalar_prefetch = 0 : i64, scratch_operands = 4 : i64, tpu.core_type = #tpu.core_type<tc>} {
    %cst = arith.constant 0.000000e+00 : f32
    %0 = vector.broadcast %cst : f32 to vector<22x8xf32>
    %c0 = arith.constant 0 : index
    %c0_0 = arith.constant 0 : index
    %1 = vector.load %arg9[%c0, %c0_0] : memref<22x8xf32, #tpu.memory_space<vmem>>, vector<22x8xf32>
    tpu.vector_store %arg9[%c0, %c0_0], %0 {strides = array<i32>} : memref<22x8xf32, #tpu.memory_space<vmem>>, vector<22x8xf32>,
    %cst_1 = arith.constant 0.000000e+00 : f32
    %2 = vector.broadcast %cst_1 : f32 to vector<22x8xf32>
    %c0_2 = arith.constant 0 : index
    %c0_3 = arith.constant 0 : index
    %3 = vector.load %arg10[%c0_2, %c0_3] : memref<22x8xf32, #tpu.memory_space<vmem>>, vector<22x8xf32>
    tpu.vector_store %arg10[%c0_2, %c0_3], %2 {strides = array<i32>} : memref<22x8xf32, #tpu.memory_space<vmem>>, vector<22x8xf32>,
    %cst_4 = arith.constant 0.000000e+00 : f32
    %4 = vector.broadcast %cst_4 : f32 to vector<22x8xf32>
    %c0_5 = arith.constant 0 : index
    %c0_6 = arith.constant 0 : index
    %5 = vector.load %arg11[%c0_5, %c0_6] : memref<22x8xf32, #tpu.memory_space<vmem>>, vector<22x8xf32>
    tpu.vector_store %arg11[%c0_5, %c0_6], %4 {strides = array<i32>} : memref<22x8xf32, #tpu.memory_space<vmem>>, vector<22x8xf32>,
    %cst_7 = arith.constant 0.000000e+00 : f32
    %6 = vector.broadcast %cst_7 : f32 to vector<22x8xf32>
    %c0_8 = arith.constant 0 : index
    %c0_9 = arith.constant 0 : index
    %7 = vector.load %arg12[%c0_8, %c0_9] : memref<22x8xf32, #tpu.memory_space<vmem>>, vector<22x8xf32>
    tpu.vector_store %arg12[%c0_8, %c0_9], %6 {strides = array<i32>} : memref<22x8xf32, #tpu.memory_space<vmem>>, vector<22x8xf32>,
    %c0_10 = arith.constant 0 : index
    %c0_11 = arith.constant 0 : index
    %8 = vector.load %arg3[%c0_10, %c0_11] : memref<8x32xf32, #tpu.memory_space<vmem>>, vector<8x32xf32>
    %c0_12 = arith.constant 0 : index
    %c0_13 = arith.constant 0 : index
    %9 = vector.load %arg4[%c0_12, %c0_13] : memref<8x32xf32, #tpu.memory_space<vmem>>, vector<8x32xf32>
    %c0_14 = arith.constant 0 : index
    %c0_15 = arith.constant 0 : index
    %10 = vector.load %arg2[%c0_14, %c0_15] : memref<22x1xi32, #tpu.memory_space<vmem>>, vector<22x1xi32>
    %c0_i32 = arith.constant 0 : i32
    %c3_i32 = arith.constant 3 : i32
    %11 = arith.subi %c3_i32, %c0_i32 : i32
    %12 = arith.index_cast %c0_i32 : i32 to index
    %c0_16 = arith.constant 0 : index
    %c0_17 = arith.constant 0 : index
    %13 = vector.load %arg0[%12, %c0_16, %c0_17] : memref<4x22x32xf32, #tpu.memory_space<vmem>>, vector<1x22x32xf32>
    %14 = vector.shape_cast %13 : vector<1x22x32xf32> to vector<22x32xf32>
    %c0_18 = arith.constant 0 : index
    %c0_19 = arith.constant 0 : index
    %15 = vector.load %arg9[%c0_18, %c0_19] : memref<22x8xf32, #tpu.memory_space<vmem>>, vector<22x8xf32>
    %cst_20 = arith.constant dense<0.000000e+00> : vector<22x32xf32>
    %16 = tpu.matmul %15, %8, %cst_20 {dimension_numbers = #tpu.dot_dimension_numbers<[1], [0], [0], [1], [0, 0, 1, 1], [], []>} : vector<22x8xf32>, vector<8x32xf32>, vector<22x32xf32> -> vector<22x32xf32>
    %17 = arith.addf %14, %16 : vector<22x32xf32>
    %c0_21 = arith.constant 0 : index
    %c0_22 = arith.constant 0 : index
    %18 = vector.load %arg9[%c0_21, %c0_22] : memref<22x8xf32, #tpu.memory_space<vmem>>, vector<22x8xf32>
    %c0_23 = arith.constant 0 : index
    %c0_24 = arith.constant 0 : index
    %19 = vector.load %arg10[%c0_23, %c0_24] : memref<22x8xf32, #tpu.memory_space<vmem>>, vector<22x8xf32>
    %20 = vector.broadcast %c0_i32 : i32 to vector<22x1xi32>
    %21 = arith.cmpi slt, %20, %10 : vector<22x1xi32>
    %22 = vector.extract_strided_slice %17 {offsets = [0, 0], sizes = [22, 8], strides = [1, 1]} : vector<22x32xf32> to vector<22x8xf32>
    %23 = arith.negf %22 : vector<22x8xf32>
    %24 = math.exp %23 : vector<22x8xf32>
    %cst_25 = arith.constant 1.000000e+00 : f32
    %25 = vector.broadcast %cst_25 : f32 to vector<22x8xf32>
    %26 = arith.addf %25, %24 : vector<22x8xf32>
    %27 = arith.divf %25, %26 : vector<22x8xf32>
    %28 = vector.extract_strided_slice %17 {offsets = [0, 8], sizes = [22, 8], strides = [1, 1]} : vector<22x32xf32> to vector<22x8xf32>
    %29 = arith.negf %28 : vector<22x8xf32>
    %30 = math.exp %29 : vector<22x8xf32>
    %cst_26 = arith.constant 1.000000e+00 : f32
    %31 = vector.broadcast %cst_26 : f32 to vector<22x8xf32>
    %32 = arith.addf %31, %30 : vector<22x8xf32>
    %33 = arith.divf %31, %32 : vector<22x8xf32>
    %34 = vector.extract_strided_slice %17 {offsets = [0, 16], sizes = [22, 8], strides = [1, 1]} : vector<22x32xf32> to vector<22x8xf32>
    %35 = math.tanh %34 : vector<22x8xf32>
    %36 = vector.extract_strided_slice %17 {offsets = [0, 24], sizes = [22, 8], strides = [1, 1]} : vector<22x32xf32> to vector<22x8xf32>
    %37 = arith.negf %36 : vector<22x8xf32>
    %38 = math.exp %37 : vector<22x8xf32>
    %cst_27 = arith.constant 1.000000e+00 : f32
    %39 = vector.broadcast %cst_27 : f32 to vector<22x8xf32>
    %40 = arith.addf %39, %38 : vector<22x8xf32>
    %41 = arith.divf %39, %40 : vector<22x8xf32>
    %42 = arith.mulf %33, %19 : vector<22x8xf32>
    %43 = arith.mulf %27, %35 : vector<22x8xf32>
    %44 = arith.addf %42, %43 : vector<22x8xf32>
    %45 = math.tanh %44 : vector<22x8xf32>
    %46 = arith.mulf %41, %45 : vector<22x8xf32>
    %47 = vector.shape_cast %21 : vector<22x1xi1> to vector<22x1xi1>
    %48 = vector.broadcast %47 : vector<22x1xi1> to vector<22x8xi1>
    %49 = arith.select %48, %46, %18 : vector<22x8xi1>, vector<22x8xf32>
    %50 = vector.shape_cast %21 : vector<22x1xi1> to vector<22x1xi1>
    %51 = vector.broadcast %50 : vector<22x1xi1> to vector<22x8xi1>
    %52 = arith.select %51, %44, %19 : vector<22x8xi1>, vector<22x8xf32>
    %cst_28 = arith.constant 0.000000e+00 : f32
    %53 = vector.broadcast %cst_28 : f32 to vector<22x8xf32>
    %54 = vector.shape_cast %21 : vector<22x1xi1> to vector<22x1xi1>
    %55 = vector.broadcast %54 : vector<22x1xi1> to vector<22x8xi1>
    %56 = arith.select %55, %46, %53 : vector<22x8xi1>, vector<22x8xf32>
    %c0_29 = arith.constant 0 : index
    %c0_30 = arith.constant 0 : index
    %57 = vector.load %arg9[%c0_29, %c0_30] : memref<22x8xf32, #tpu.memory_space<vmem>>, vector<22x8xf32>
    tpu.vector_store %arg9[%c0_29, %c0_30], %49 {strides = array<i32>} : memref<22x8xf32, #tpu.memory_space<vmem>>, vector<22x8xf32>,
    %c0_31 = arith.constant 0 : index
    %c0_32 = arith.constant 0 : index
    %58 = vector.load %arg10[%c0_31, %c0_32] : memref<22x8xf32, #tpu.memory_space<vmem>>, vector<22x8xf32>
    tpu.vector_store %arg10[%c0_31, %c0_32], %52 {strides = array<i32>} : memref<22x8xf32, #tpu.memory_space<vmem>>, vector<22x8xf32>,
    %59 = arith.index_cast %c0_i32 : i32 to index
    %c0_33 = arith.constant 0 : index
    %c0_34 = arith.constant 0 : index
    %60 = vector.load %arg5[%59, %c0_33, %c0_34] : memref<4x22x8xf32, #tpu.memory_space<vmem>>, vector<1x22x8xf32>
    %61 = vector.shape_cast %60 : vector<1x22x8xf32> to vector<22x8xf32>
    %62 = vector.shape_cast %56 : vector<22x8xf32> to vector<1x22x8xf32>
    tpu.vector_store %arg5[%59, %c0_33, %c0_34], %62 {strides = array<i32>} : memref<4x22x8xf32, #tpu.memory_space<vmem>>, vector<1x22x8xf32>,
    %63 = arith.index_cast %11 : i32 to index
    %c0_35 = arith.constant 0 : index
    %c0_36 = arith.constant 0 : index
    %64 = vector.load %arg1[%63, %c0_35, %c0_36] : memref<4x22x32xf32, #tpu.memory_space<vmem>>, vector<1x22x32xf32>
    %65 = vector.shape_cast %64 : vector<1x22x32xf32> to vector<22x32xf32>
    %c0_37 = arith.constant 0 : index
    %c0_38 = arith.constant 0 : index
    %66 = vector.load %arg11[%c0_37, %c0_38] : memref<22x8xf32, #tpu.memory_space<vmem>>, vector<22x8xf32>
    %cst_39 = arith.constant dense<0.000000e+00> : vector<22x32xf32>
    %67 = tpu.matmul %66, %9, %cst_39 {dimension_numbers = #tpu.dot_dimension_numbers<[1], [0], [0], [1], [0, 0, 1, 1], [], []>} : vector<22x8xf32>, vector<8x32xf32>, vector<22x32xf32> -> vector<22x32xf32>
    %68 = arith.addf %65, %67 : vector<22x32xf32>
    %c0_40 = arith.constant 0 : index
    %c0_41 = arith.constant 0 : index
    %69 = vector.load %arg11[%c0_40, %c0_41] : memref<22x8xf32, #tpu.memory_space<vmem>>, vector<22x8xf32>
    %c0_42 = arith.constant 0 : index
    %c0_43 = arith.constant 0 : index
    %70 = vector.load %arg12[%c0_42, %c0_43] : memref<22x8xf32, #tpu.memory_space<vmem>>, vector<22x8xf32>
    %71 = vector.broadcast %11 : i32 to vector<22x1xi32>
    %72 = arith.cmpi slt, %71, %10 : vector<22x1xi32>
    %73 = vector.extract_strided_slice %68 {offsets = [0, 0], sizes = [22, 8], strides = [1, 1]} : vector<22x32xf32> to vector<22x8xf32>
    %74 = arith.negf %73 : vector<22x8xf32>
    %75 = math.exp %74 : vector<22x8xf32>
    %cst_44 = arith.constant 1.000000e+00 : f32
    %76 = vector.broadcast %cst_44 : f32 to vector<22x8xf32>
    %77 = arith.addf %76, %75 : vector<22x8xf32>
    %78 = arith.divf %76, %77 : vector<22x8xf32>
    %79 = vector.extract_strided_slice %68 {offsets = [0, 8], sizes = [22, 8], strides = [1, 1]} : vector<22x32xf32> to vector<22x8xf32>
    %80 = arith.negf %79 : vector<22x8xf32>
    %81 = math.exp %80 : vector<22x8xf32>
    %cst_45 = arith.constant 1.000000e+00 : f32
    %82 = vector.broadcast %cst_45 : f32 to vector<22x8xf32>
    %83 = arith.addf %82, %81 : vector<22x8xf32>
    %84 = arith.divf %82, %83 : vector<22x8xf32>
    %85 = vector.extract_strided_slice %68 {offsets = [0, 16], sizes = [22, 8], strides = [1, 1]} : vector<22x32xf32> to vector<22x8xf32>
    %86 = math.tanh %85 : vector<22x8xf32>
    %87 = vector.extract_strided_slice %68 {offsets = [0, 24], sizes = [22, 8], strides = [1, 1]} : vector<22x32xf32> to vector<22x8xf32>
    %88 = arith.negf %87 : vector<22x8xf32>
    %89 = math.exp %88 : vector<22x8xf32>
    %cst_46 = arith.constant 1.000000e+00 : f32
    %90 = vector.broadcast %cst_46 : f32 to vector<22x8xf32>
    %91 = arith.addf %90, %89 : vector<22x8xf32>
    %92 = arith.divf %90, %91 : vector<22x8xf32>
    %93 = arith.mulf %84, %70 : vector<22x8xf32>
    %94 = arith.mulf %78, %86 : vector<22x8xf32>
    %95 = arith.addf %93, %94 : vector<22x8xf32>
    %96 = math.tanh %95 : vector<22x8xf32>
    %97 = arith.mulf %92, %96 : vector<22x8xf32>
    %98 = vector.shape_cast %72 : vector<22x1xi1> to vector<22x1xi1>
    %99 = vector.broadcast %98 : vector<22x1xi1> to vector<22x8xi1>
    %100 = arith.select %99, %97, %69 : vector<22x8xi1>, vector<22x8xf32>
    %101 = vector.shape_cast %72 : vector<22x1xi1> to vector<22x1xi1>
    %102 = vector.broadcast %101 : vector<22x1xi1> to vector<22x8xi1>
    %103 = arith.select %102, %95, %70 : vector<22x8xi1>, vector<22x8xf32>
    %cst_47 = arith.constant 0.000000e+00 : f32
    %104 = vector.broadcast %cst_47 : f32 to vector<22x8xf32>
    %105 = vector.shape_cast %72 : vector<22x1xi1> to vector<22x1xi1>
    %106 = vector.broadcast %105 : vector<22x1xi1> to vector<22x8xi1>
    %107 = arith.select %106, %97, %104 : vector<22x8xi1>, vector<22x8xf32>
    %c0_48 = arith.constant 0 : index
    %c0_49 = arith.constant 0 : index
    %108 = vector.load %arg11[%c0_48, %c0_49] : memref<22x8xf32, #tpu.memory_space<vmem>>, vector<22x8xf32>
    tpu.vector_store %arg11[%c0_48, %c0_49], %100 {strides = array<i32>} : memref<22x8xf32, #tpu.memory_space<vmem>>, vector<22x8xf32>,
    %c0_50 = arith.constant 0 : index
    %c0_51 = arith.constant 0 : index
    %109 = vector.load %arg12[%c0_50, %c0_51] : memref<22x8xf32, #tpu.memory_space<vmem>>, vector<22x8xf32>
    tpu.vector_store %arg12[%c0_50, %c0_51], %103 {strides = array<i32>} : memref<22x8xf32, #tpu.memory_space<vmem>>, vector<22x8xf32>,
    %110 = arith.index_cast %11 : i32 to index
    %c0_52 = arith.constant 0 : index
    %c0_53 = arith.constant 0 : index
    %111 = vector.load %arg6[%110, %c0_52, %c0_53] : memref<4x22x8xf32, #tpu.memory_space<vmem>>, vector<1x22x8xf32>
    %112 = vector.shape_cast %111 : vector<1x22x8xf32> to vector<22x8xf32>
    %113 = vector.shape_cast %107 : vector<22x8xf32> to vector<1x22x8xf32>
    tpu.vector_store %arg6[%110, %c0_52, %c0_53], %113 {strides = array<i32>} : memref<4x22x8xf32, #tpu.memory_space<vmem>>, vector<1x22x8xf32>,
    %c1_i32 = arith.constant 1 : i32
    %c3_i32_54 = arith.constant 3 : i32
    %114 = arith.subi %c3_i32_54, %c1_i32 : i32
    %115 = arith.index_cast %c1_i32 : i32 to index
    %c0_55 = arith.constant 0 : index
    %c0_56 = arith.constant 0 : index
    %116 = vector.load %arg0[%115, %c0_55, %c0_56] : memref<4x22x32xf32, #tpu.memory_space<vmem>>, vector<1x22x32xf32>
    %117 = vector.shape_cast %116 : vector<1x22x32xf32> to vector<22x32xf32>
    %c0_57 = arith.constant 0 : index
    %c0_58 = arith.constant 0 : index
    %118 = vector.load %arg9[%c0_57, %c0_58] : memref<22x8xf32, #tpu.memory_space<vmem>>, vector<22x8xf32>
    %cst_59 = arith.constant dense<0.000000e+00> : vector<22x32xf32>
    %119 = tpu.matmul %118, %8, %cst_59 {dimension_numbers = #tpu.dot_dimension_numbers<[1], [0], [0], [1], [0, 0, 1, 1], [], []>} : vector<22x8xf32>, vector<8x32xf32>, vector<22x32xf32> -> vector<22x32xf32>
    %120 = arith.addf %117, %119 : vector<22x32xf32>
    %c0_60 = arith.constant 0 : index
    %c0_61 = arith.constant 0 : index
    %121 = vector.load %arg9[%c0_60, %c0_61] : memref<22x8xf32, #tpu.memory_space<vmem>>, vector<22x8xf32>
    %c0_62 = arith.constant 0 : index
    %c0_63 = arith.constant 0 : index
    %122 = vector.load %arg10[%c0_62, %c0_63] : memref<22x8xf32, #tpu.memory_space<vmem>>, vector<22x8xf32>
    %123 = vector.broadcast %c1_i32 : i32 to vector<22x1xi32>
    %124 = arith.cmpi slt, %123, %10 : vector<22x1xi32>
    %125 = vector.extract_strided_slice %120 {offsets = [0, 0], sizes = [22, 8], strides = [1, 1]} : vector<22x32xf32> to vector<22x8xf32>
    %126 = arith.negf %125 : vector<22x8xf32>
    %127 = math.exp %126 : vector<22x8xf32>
    %cst_64 = arith.constant 1.000000e+00 : f32
    %128 = vector.broadcast %cst_64 : f32 to vector<22x8xf32>
    %129 = arith.addf %128, %127 : vector<22x8xf32>
    %130 = arith.divf %128, %129 : vector<22x8xf32>
    %131 = vector.extract_strided_slice %120 {offsets = [0, 8], sizes = [22, 8], strides = [1, 1]} : vector<22x32xf32> to vector<22x8xf32>
    %132 = arith.negf %131 : vector<22x8xf32>
    %133 = math.exp %132 : vector<22x8xf32>
    %cst_65 = arith.constant 1.000000e+00 : f32
    %134 = vector.broadcast %cst_65 : f32 to vector<22x8xf32>
    %135 = arith.addf %134, %133 : vector<22x8xf32>
    %136 = arith.divf %134, %135 : vector<22x8xf32>
    %137 = vector.extract_strided_slice %120 {offsets = [0, 16], sizes = [22, 8], strides = [1, 1]} : vector<22x32xf32> to vector<22x8xf32>
    %138 = math.tanh %137 : vector<22x8xf32>
    %139 = vector.extract_strided_slice %120 {offsets = [0, 24], sizes = [22, 8], strides = [1, 1]} : vector<22x32xf32> to vector<22x8xf32>
    %140 = arith.negf %139 : vector<22x8xf32>
    %141 = math.exp %140 : vector<22x8xf32>
    %cst_66 = arith.constant 1.000000e+00 : f32
    %142 = vector.broadcast %cst_66 : f32 to vector<22x8xf32>
    %143 = arith.addf %142, %141 : vector<22x8xf32>
    %144 = arith.divf %142, %143 : vector<22x8xf32>
    %145 = arith.mulf %136, %122 : vector<22x8xf32>
    %146 = arith.mulf %130, %138 : vector<22x8xf32>
    %147 = arith.addf %145, %146 : vector<22x8xf32>
    %148 = math.tanh %147 : vector<22x8xf32>
    %149 = arith.mulf %144, %148 : vector<22x8xf32>
    %150 = vector.shape_cast %124 : vector<22x1xi1> to vector<22x1xi1>
    %151 = vector.broadcast %150 : vector<22x1xi1> to vector<22x8xi1>
    %152 = arith.select %151, %149, %121 : vector<22x8xi1>, vector<22x8xf32>
    %153 = vector.shape_cast %124 : vector<22x1xi1> to vector<22x1xi1>
    %154 = vector.broadcast %153 : vector<22x1xi1> to vector<22x8xi1>
    %155 = arith.select %154, %147, %122 : vector<22x8xi1>, vector<22x8xf32>
    %cst_67 = arith.constant 0.000000e+00 : f32
    %156 = vector.broadcast %cst_67 : f32 to vector<22x8xf32>
    %157 = vector.shape_cast %124 : vector<22x1xi1> to vector<22x1xi1>
    %158 = vector.broadcast %157 : vector<22x1xi1> to vector<22x8xi1>
    %159 = arith.select %158, %149, %156 : vector<22x8xi1>, vector<22x8xf32>
    %c0_68 = arith.constant 0 : index
    %c0_69 = arith.constant 0 : index
    %160 = vector.load %arg9[%c0_68, %c0_69] : memref<22x8xf32, #tpu.memory_space<vmem>>, vector<22x8xf32>
    tpu.vector_store %arg9[%c0_68, %c0_69], %152 {strides = array<i32>} : memref<22x8xf32, #tpu.memory_space<vmem>>, vector<22x8xf32>,
    %c0_70 = arith.constant 0 : index
    %c0_71 = arith.constant 0 : index
    %161 = vector.load %arg10[%c0_70, %c0_71] : memref<22x8xf32, #tpu.memory_space<vmem>>, vector<22x8xf32>
    tpu.vector_store %arg10[%c0_70, %c0_71], %155 {strides = array<i32>} : memref<22x8xf32, #tpu.memory_space<vmem>>, vector<22x8xf32>,
    %162 = arith.index_cast %c1_i32 : i32 to index
    %c0_72 = arith.constant 0 : index
    %c0_73 = arith.constant 0 : index
    %163 = vector.load %arg5[%162, %c0_72, %c0_73] : memref<4x22x8xf32, #tpu.memory_space<vmem>>, vector<1x22x8xf32>
    %164 = vector.shape_cast %163 : vector<1x22x8xf32> to vector<22x8xf32>
    %165 = vector.shape_cast %159 : vector<22x8xf32> to vector<1x22x8xf32>
    tpu.vector_store %arg5[%162, %c0_72, %c0_73], %165 {strides = array<i32>} : memref<4x22x8xf32, #tpu.memory_space<vmem>>, vector<1x22x8xf32>,
    %166 = arith.index_cast %114 : i32 to index
    %c0_74 = arith.constant 0 : index
    %c0_75 = arith.constant 0 : index
    %167 = vector.load %arg1[%166, %c0_74, %c0_75] : memref<4x22x32xf32, #tpu.memory_space<vmem>>, vector<1x22x32xf32>
    %168 = vector.shape_cast %167 : vector<1x22x32xf32> to vector<22x32xf32>
    %c0_76 = arith.constant 0 : index
    %c0_77 = arith.constant 0 : index
    %169 = vector.load %arg11[%c0_76, %c0_77] : memref<22x8xf32, #tpu.memory_space<vmem>>, vector<22x8xf32>
    %cst_78 = arith.constant dense<0.000000e+00> : vector<22x32xf32>
    %170 = tpu.matmul %169, %9, %cst_78 {dimension_numbers = #tpu.dot_dimension_numbers<[1], [0], [0], [1], [0, 0, 1, 1], [], []>} : vector<22x8xf32>, vector<8x32xf32>, vector<22x32xf32> -> vector<22x32xf32>
    %171 = arith.addf %168, %170 : vector<22x32xf32>
    %c0_79 = arith.constant 0 : index
    %c0_80 = arith.constant 0 : index
    %172 = vector.load %arg11[%c0_79, %c0_80] : memref<22x8xf32, #tpu.memory_space<vmem>>, vector<22x8xf32>
    %c0_81 = arith.constant 0 : index
    %c0_82 = arith.constant 0 : index
    %173 = vector.load %arg12[%c0_81, %c0_82] : memref<22x8xf32, #tpu.memory_space<vmem>>, vector<22x8xf32>
    %174 = vector.broadcast %114 : i32 to vector<22x1xi32>
    %175 = arith.cmpi slt, %174, %10 : vector<22x1xi32>
    %176 = vector.extract_strided_slice %171 {offsets = [0, 0], sizes = [22, 8], strides = [1, 1]} : vector<22x32xf32> to vector<22x8xf32>
    %177 = arith.negf %176 : vector<22x8xf32>
    %178 = math.exp %177 : vector<22x8xf32>
    %cst_83 = arith.constant 1.000000e+00 : f32
    %179 = vector.broadcast %cst_83 : f32 to vector<22x8xf32>
    %180 = arith.addf %179, %178 : vector<22x8xf32>
    %181 = arith.divf %179, %180 : vector<22x8xf32>
    %182 = vector.extract_strided_slice %171 {offsets = [0, 8], sizes = [22, 8], strides = [1, 1]} : vector<22x32xf32> to vector<22x8xf32>
    %183 = arith.negf %182 : vector<22x8xf32>
    %184 = math.exp %183 : vector<22x8xf32>
    %cst_84 = arith.constant 1.000000e+00 : f32
    %185 = vector.broadcast %cst_84 : f32 to vector<22x8xf32>
    %186 = arith.addf %185, %184 : vector<22x8xf32>
    %187 = arith.divf %185, %186 : vector<22x8xf32>
    %188 = vector.extract_strided_slice %171 {offsets = [0, 16], sizes = [22, 8], strides = [1, 1]} : vector<22x32xf32> to vector<22x8xf32>
    %189 = math.tanh %188 : vector<22x8xf32>
    %190 = vector.extract_strided_slice %171 {offsets = [0, 24], sizes = [22, 8], strides = [1, 1]} : vector<22x32xf32> to vector<22x8xf32>
    %191 = arith.negf %190 : vector<22x8xf32>
    %192 = math.exp %191 : vector<22x8xf32>
    %cst_85 = arith.constant 1.000000e+00 : f32
    %193 = vector.broadcast %cst_85 : f32 to vector<22x8xf32>
    %194 = arith.addf %193, %192 : vector<22x8xf32>
    %195 = arith.divf %193, %194 : vector<22x8xf32>
    %196 = arith.mulf %187, %173 : vector<22x8xf32>
    %197 = arith.mulf %181, %189 : vector<22x8xf32>
    %198 = arith.addf %196, %197 : vector<22x8xf32>
    %199 = math.tanh %198 : vector<22x8xf32>
    %200 = arith.mulf %195, %199 : vector<22x8xf32>
    %201 = vector.shape_cast %175 : vector<22x1xi1> to vector<22x1xi1>
    %202 = vector.broadcast %201 : vector<22x1xi1> to vector<22x8xi1>
    %203 = arith.select %202, %200, %172 : vector<22x8xi1>, vector<22x8xf32>
    %204 = vector.shape_cast %175 : vector<22x1xi1> to vector<22x1xi1>
    %205 = vector.broadcast %204 : vector<22x1xi1> to vector<22x8xi1>
    %206 = arith.select %205, %198, %173 : vector<22x8xi1>, vector<22x8xf32>
    %cst_86 = arith.constant 0.000000e+00 : f32
    %207 = vector.broadcast %cst_86 : f32 to vector<22x8xf32>
    %208 = vector.shape_cast %175 : vector<22x1xi1> to vector<22x1xi1>
    %209 = vector.broadcast %208 : vector<22x1xi1> to vector<22x8xi1>
    %210 = arith.select %209, %200, %207 : vector<22x8xi1>, vector<22x8xf32>
    %c0_87 = arith.constant 0 : index
    %c0_88 = arith.constant 0 : index
    %211 = vector.load %arg11[%c0_87, %c0_88] : memref<22x8xf32, #tpu.memory_space<vmem>>, vector<22x8xf32>
    tpu.vector_store %arg11[%c0_87, %c0_88], %203 {strides = array<i32>} : memref<22x8xf32, #tpu.memory_space<vmem>>, vector<22x8xf32>,
    %c0_89 = arith.constant 0 : index
    %c0_90 = arith.constant 0 : index
    %212 = vector.load %arg12[%c0_89, %c0_90] : memref<22x8xf32, #tpu.memory_space<vmem>>, vector<22x8xf32>
    tpu.vector_store %arg12[%c0_89, %c0_90], %206 {strides = array<i32>} : memref<22x8xf32, #tpu.memory_space<vmem>>, vector<22x8xf32>,
    %213 = arith.index_cast %114 : i32 to index
    %c0_91 = arith.constant 0 : index
    %c0_92 = arith.constant 0 : index
    %214 = vector.load %arg6[%213, %c0_91, %c0_92] : memref<4x22x8xf32, #tpu.memory_space<vmem>>, vector<1x22x8xf32>
    %215 = vector.shape_cast %214 : vector<1x22x8xf32> to vector<22x8xf32>
    %216 = vector.shape_cast %210 : vector<22x8xf32> to vector<1x22x8xf32>
    tpu.vector_store %arg6[%213, %c0_91, %c0_92], %216 {strides = array<i32>} : memref<4x22x8xf32, #tpu.memory_space<vmem>>, vector<1x22x8xf32>,
    %c2_i32 = arith.constant 2 : i32
    %c3_i32_93 = arith.constant 3 : i32
    %217 = arith.subi %c3_i32_93, %c2_i32 : i32
    %218 = arith.index_cast %c2_i32 : i32 to index
    %c0_94 = arith.constant 0 : index
    %c0_95 = arith.constant 0 : index
    %219 = vector.load %arg0[%218, %c0_94, %c0_95] : memref<4x22x32xf32, #tpu.memory_space<vmem>>, vector<1x22x32xf32>
    %220 = vector.shape_cast %219 : vector<1x22x32xf32> to vector<22x32xf32>
    %c0_96 = arith.constant 0 : index
    %c0_97 = arith.constant 0 : index
    %221 = vector.load %arg9[%c0_96, %c0_97] : memref<22x8xf32, #tpu.memory_space<vmem>>, vector<22x8xf32>
    %cst_98 = arith.constant dense<0.000000e+00> : vector<22x32xf32>
    %222 = tpu.matmul %221, %8, %cst_98 {dimension_numbers = #tpu.dot_dimension_numbers<[1], [0], [0], [1], [0, 0, 1, 1], [], []>} : vector<22x8xf32>, vector<8x32xf32>, vector<22x32xf32> -> vector<22x32xf32>
    %223 = arith.addf %220, %222 : vector<22x32xf32>
    %c0_99 = arith.constant 0 : index
    %c0_100 = arith.constant 0 : index
    %224 = vector.load %arg9[%c0_99, %c0_100] : memref<22x8xf32, #tpu.memory_space<vmem>>, vector<22x8xf32>
    %c0_101 = arith.constant 0 : index
    %c0_102 = arith.constant 0 : index
    %225 = vector.load %arg10[%c0_101, %c0_102] : memref<22x8xf32, #tpu.memory_space<vmem>>, vector<22x8xf32>
    %226 = vector.broadcast %c2_i32 : i32 to vector<22x1xi32>
    %227 = arith.cmpi slt, %226, %10 : vector<22x1xi32>
    %228 = vector.extract_strided_slice %223 {offsets = [0, 0], sizes = [22, 8], strides = [1, 1]} : vector<22x32xf32> to vector<22x8xf32>
    %229 = arith.negf %228 : vector<22x8xf32>
    %230 = math.exp %229 : vector<22x8xf32>
    %cst_103 = arith.constant 1.000000e+00 : f32
    %231 = vector.broadcast %cst_103 : f32 to vector<22x8xf32>
    %232 = arith.addf %231, %230 : vector<22x8xf32>
    %233 = arith.divf %231, %232 : vector<22x8xf32>
    %234 = vector.extract_strided_slice %223 {offsets = [0, 8], sizes = [22, 8], strides = [1, 1]} : vector<22x32xf32> to vector<22x8xf32>
    %235 = arith.negf %234 : vector<22x8xf32>
    %236 = math.exp %235 : vector<22x8xf32>
    %cst_104 = arith.constant 1.000000e+00 : f32
    %237 = vector.broadcast %cst_104 : f32 to vector<22x8xf32>
    %238 = arith.addf %237, %236 : vector<22x8xf32>
    %239 = arith.divf %237, %238 : vector<22x8xf32>
    %240 = vector.extract_strided_slice %223 {offsets = [0, 16], sizes = [22, 8], strides = [1, 1]} : vector<22x32xf32> to vector<22x8xf32>
    %241 = math.tanh %240 : vector<22x8xf32>
    %242 = vector.extract_strided_slice %223 {offsets = [0, 24], sizes = [22, 8], strides = [1, 1]} : vector<22x32xf32> to vector<22x8xf32>
    %243 = arith.negf %242 : vector<22x8xf32>
    %244 = math.exp %243 : vector<22x8xf32>
    %cst_105 = arith.constant 1.000000e+00 : f32
    %245 = vector.broadcast %cst_105 : f32 to vector<22x8xf32>
    %246 = arith.addf %245, %244 : vector<22x8xf32>
    %247 = arith.divf %245, %246 : vector<22x8xf32>
    %248 = arith.mulf %239, %225 : vector<22x8xf32>
    %249 = arith.mulf %233, %241 : vector<22x8xf32>
    %250 = arith.addf %248, %249 : vector<22x8xf32>
    %251 = math.tanh %250 : vector<22x8xf32>
    %252 = arith.mulf %247, %251 : vector<22x8xf32>
    %253 = vector.shape_cast %227 : vector<22x1xi1> to vector<22x1xi1>
    %254 = vector.broadcast %253 : vector<22x1xi1> to vector<22x8xi1>
    %255 = arith.select %254, %252, %224 : vector<22x8xi1>, vector<22x8xf32>
    %256 = vector.shape_cast %227 : vector<22x1xi1> to vector<22x1xi1>
    %257 = vector.broadcast %256 : vector<22x1xi1> to vector<22x8xi1>
    %258 = arith.select %257, %250, %225 : vector<22x8xi1>, vector<22x8xf32>
    %cst_106 = arith.constant 0.000000e+00 : f32
    %259 = vector.broadcast %cst_106 : f32 to vector<22x8xf32>
    %260 = vector.shape_cast %227 : vector<22x1xi1> to vector<22x1xi1>
    %261 = vector.broadcast %260 : vector<22x1xi1> to vector<22x8xi1>
    %262 = arith.select %261, %252, %259 : vector<22x8xi1>, vector<22x8xf32>
    %c0_107 = arith.constant 0 : index
    %c0_108 = arith.constant 0 : index
    %263 = vector.load %arg9[%c0_107, %c0_108] : memref<22x8xf32, #tpu.memory_space<vmem>>, vector<22x8xf32>
    tpu.vector_store %arg9[%c0_107, %c0_108], %255 {strides = array<i32>} : memref<22x8xf32, #tpu.memory_space<vmem>>, vector<22x8xf32>,
    %c0_109 = arith.constant 0 : index
    %c0_110 = arith.constant 0 : index
    %264 = vector.load %arg10[%c0_109, %c0_110] : memref<22x8xf32, #tpu.memory_space<vmem>>, vector<22x8xf32>
    tpu.vector_store %arg10[%c0_109, %c0_110], %258 {strides = array<i32>} : memref<22x8xf32, #tpu.memory_space<vmem>>, vector<22x8xf32>,
    %265 = arith.index_cast %c2_i32 : i32 to index
    %c0_111 = arith.constant 0 : index
    %c0_112 = arith.constant 0 : index
    %266 = vector.load %arg5[%265, %c0_111, %c0_112] : memref<4x22x8xf32, #tpu.memory_space<vmem>>, vector<1x22x8xf32>
    %267 = vector.shape_cast %266 : vector<1x22x8xf32> to vector<22x8xf32>
    %268 = vector.shape_cast %262 : vector<22x8xf32> to vector<1x22x8xf32>
    tpu.vector_store %arg5[%265, %c0_111, %c0_112], %268 {strides = array<i32>} : memref<4x22x8xf32, #tpu.memory_space<vmem>>, vector<1x22x8xf32>,
    %269 = arith.index_cast %217 : i32 to index
    %c0_113 = arith.constant 0 : index
    %c0_114 = arith.constant 0 : index
    %270 = vector.load %arg1[%269, %c0_113, %c0_114] : memref<4x22x32xf32, #tpu.memory_space<vmem>>, vector<1x22x32xf32>
    %271 = vector.shape_cast %270 : vector<1x22x32xf32> to vector<22x32xf32>
    %c0_115 = arith.constant 0 : index
    %c0_116 = arith.constant 0 : index
    %272 = vector.load %arg11[%c0_115, %c0_116] : memref<22x8xf32, #tpu.memory_space<vmem>>, vector<22x8xf32>
    %cst_117 = arith.constant dense<0.000000e+00> : vector<22x32xf32>
    %273 = tpu.matmul %272, %9, %cst_117 {dimension_numbers = #tpu.dot_dimension_numbers<[1], [0], [0], [1], [0, 0, 1, 1], [], []>} : vector<22x8xf32>, vector<8x32xf32>, vector<22x32xf32> -> vector<22x32xf32>
    %274 = arith.addf %271, %273 : vector<22x32xf32>
    %c0_118 = arith.constant 0 : index
    %c0_119 = arith.constant 0 : index
    %275 = vector.load %arg11[%c0_118, %c0_119] : memref<22x8xf32, #tpu.memory_space<vmem>>, vector<22x8xf32>
    %c0_120 = arith.constant 0 : index
    %c0_121 = arith.constant 0 : index
    %276 = vector.load %arg12[%c0_120, %c0_121] : memref<22x8xf32, #tpu.memory_space<vmem>>, vector<22x8xf32>
    %277 = vector.broadcast %217 : i32 to vector<22x1xi32>
    %278 = arith.cmpi slt, %277, %10 : vector<22x1xi32>
    %279 = vector.extract_strided_slice %274 {offsets = [0, 0], sizes = [22, 8], strides = [1, 1]} : vector<22x32xf32> to vector<22x8xf32>
    %280 = arith.negf %279 : vector<22x8xf32>
    %281 = math.exp %280 : vector<22x8xf32>
    %cst_122 = arith.constant 1.000000e+00 : f32
    %282 = vector.broadcast %cst_122 : f32 to vector<22x8xf32>
    %283 = arith.addf %282, %281 : vector<22x8xf32>
    %284 = arith.divf %282, %283 : vector<22x8xf32>
    %285 = vector.extract_strided_slice %274 {offsets = [0, 8], sizes = [22, 8], strides = [1, 1]} : vector<22x32xf32> to vector<22x8xf32>
    %286 = arith.negf %285 : vector<22x8xf32>
    %287 = math.exp %286 : vector<22x8xf32>
    %cst_123 = arith.constant 1.000000e+00 : f32
    %288 = vector.broadcast %cst_123 : f32 to vector<22x8xf32>
    %289 = arith.addf %288, %287 : vector<22x8xf32>
    %290 = arith.divf %288, %289 : vector<22x8xf32>
    %291 = vector.extract_strided_slice %274 {offsets = [0, 16], sizes = [22, 8], strides = [1, 1]} : vector<22x32xf32> to vector<22x8xf32>
    %292 = math.tanh %291 : vector<22x8xf32>
    %293 = vector.extract_strided_slice %274 {offsets = [0, 24], sizes = [22, 8], strides = [1, 1]} : vector<22x32xf32> to vector<22x8xf32>
    %294 = arith.negf %293 : vector<22x8xf32>
    %295 = math.exp %294 : vector<22x8xf32>
    %cst_124 = arith.constant 1.000000e+00 : f32
    %296 = vector.broadcast %cst_124 : f32 to vector<22x8xf32>
    %297 = arith.addf %296, %295 : vector<22x8xf32>
    %298 = arith.divf %296, %297 : vector<22x8xf32>
    %299 = arith.mulf %290, %276 : vector<22x8xf32>
    %300 = arith.mulf %284, %292 : vector<22x8xf32>
    %301 = arith.addf %299, %300 : vector<22x8xf32>
    %302 = math.tanh %301 : vector<22x8xf32>
    %303 = arith.mulf %298, %302 : vector<22x8xf32>
    %304 = vector.shape_cast %278 : vector<22x1xi1> to vector<22x1xi1>
    %305 = vector.broadcast %304 : vector<22x1xi1> to vector<22x8xi1>
    %306 = arith.select %305, %303, %275 : vector<22x8xi1>, vector<22x8xf32>
    %307 = vector.shape_cast %278 : vector<22x1xi1> to vector<22x1xi1>
    %308 = vector.broadcast %307 : vector<22x1xi1> to vector<22x8xi1>
    %309 = arith.select %308, %301, %276 : vector<22x8xi1>, vector<22x8xf32>
    %cst_125 = arith.constant 0.000000e+00 : f32
    %310 = vector.broadcast %cst_125 : f32 to vector<22x8xf32>
    %311 = vector.shape_cast %278 : vector<22x1xi1> to vector<22x1xi1>
    %312 = vector.broadcast %311 : vector<22x1xi1> to vector<22x8xi1>
    %313 = arith.select %312, %303, %310 : vector<22x8xi1>, vector<22x8xf32>
    %c0_126 = arith.constant 0 : index
    %c0_127 = arith.constant 0 : index
    %314 = vector.load %arg11[%c0_126, %c0_127] : memref<22x8xf32, #tpu.memory_space<vmem>>, vector<22x8xf32>
    tpu.vector_store %arg11[%c0_126, %c0_127], %306 {strides = array<i32>} : memref<22x8xf32, #tpu.memory_space<vmem>>, vector<22x8xf32>,
    %c0_128 = arith.constant 0 : index
    %c0_129 = arith.constant 0 : index
    %315 = vector.load %arg12[%c0_128, %c0_129] : memref<22x8xf32, #tpu.memory_space<vmem>>, vector<22x8xf32>
    tpu.vector_store %arg12[%c0_128, %c0_129], %309 {strides = array<i32>} : memref<22x8xf32, #tpu.memory_space<vmem>>, vector<22x8xf32>,
    %316 = arith.index_cast %217 : i32 to index
    %c0_130 = arith.constant 0 : index
    %c0_131 = arith.constant 0 : index
    %317 = vector.load %arg6[%316, %c0_130, %c0_131] : memref<4x22x8xf32, #tpu.memory_space<vmem>>, vector<1x22x8xf32>
    %318 = vector.shape_cast %317 : vector<1x22x8xf32> to vector<22x8xf32>
    %319 = vector.shape_cast %313 : vector<22x8xf32> to vector<1x22x8xf32>
    tpu.vector_store %arg6[%316, %c0_130, %c0_131], %319 {strides = array<i32>} : memref<4x22x8xf32, #tpu.memory_space<vmem>>, vector<1x22x8xf32>,
    %c3_i32_132 = arith.constant 3 : i32
    %c3_i32_133 = arith.constant 3 : i32
    %320 = arith.subi %c3_i32_133, %c3_i32_132 : i32
    %321 = arith.index_cast %c3_i32_132 : i32 to index
    %c0_134 = arith.constant 0 : index
    %c0_135 = arith.constant 0 : index
    %322 = vector.load %arg0[%321, %c0_134, %c0_135] : memref<4x22x32xf32, #tpu.memory_space<vmem>>, vector<1x22x32xf32>
    %323 = vector.shape_cast %322 : vector<1x22x32xf32> to vector<22x32xf32>
    %c0_136 = arith.constant 0 : index
    %c0_137 = arith.constant 0 : index
    %324 = vector.load %arg9[%c0_136, %c0_137] : memref<22x8xf32, #tpu.memory_space<vmem>>, vector<22x8xf32>
    %cst_138 = arith.constant dense<0.000000e+00> : vector<22x32xf32>
    %325 = tpu.matmul %324, %8, %cst_138 {dimension_numbers = #tpu.dot_dimension_numbers<[1], [0], [0], [1], [0, 0, 1, 1], [], []>} : vector<22x8xf32>, vector<8x32xf32>, vector<22x32xf32> -> vector<22x32xf32>
    %326 = arith.addf %323, %325 : vector<22x32xf32>
    %c0_139 = arith.constant 0 : index
    %c0_140 = arith.constant 0 : index
    %327 = vector.load %arg9[%c0_139, %c0_140] : memref<22x8xf32, #tpu.memory_space<vmem>>, vector<22x8xf32>
    %c0_141 = arith.constant 0 : index
    %c0_142 = arith.constant 0 : index
    %328 = vector.load %arg10[%c0_141, %c0_142] : memref<22x8xf32, #tpu.memory_space<vmem>>, vector<22x8xf32>
    %329 = vector.broadcast %c3_i32_132 : i32 to vector<22x1xi32>
    %330 = arith.cmpi slt, %329, %10 : vector<22x1xi32>
    %331 = vector.extract_strided_slice %326 {offsets = [0, 0], sizes = [22, 8], strides = [1, 1]} : vector<22x32xf32> to vector<22x8xf32>
    %332 = arith.negf %331 : vector<22x8xf32>
    %333 = math.exp %332 : vector<22x8xf32>
    %cst_143 = arith.constant 1.000000e+00 : f32
    %334 = vector.broadcast %cst_143 : f32 to vector<22x8xf32>
    %335 = arith.addf %334, %333 : vector<22x8xf32>
    %336 = arith.divf %334, %335 : vector<22x8xf32>
    %337 = vector.extract_strided_slice %326 {offsets = [0, 8], sizes = [22, 8], strides = [1, 1]} : vector<22x32xf32> to vector<22x8xf32>
    %338 = arith.negf %337 : vector<22x8xf32>
    %339 = math.exp %338 : vector<22x8xf32>
    %cst_144 = arith.constant 1.000000e+00 : f32
    %340 = vector.broadcast %cst_144 : f32 to vector<22x8xf32>
    %341 = arith.addf %340, %339 : vector<22x8xf32>
    %342 = arith.divf %340, %341 : vector<22x8xf32>
    %343 = vector.extract_strided_slice %326 {offsets = [0, 16], sizes = [22, 8], strides = [1, 1]} : vector<22x32xf32> to vector<22x8xf32>
    %344 = math.tanh %343 : vector<22x8xf32>
    %345 = vector.extract_strided_slice %326 {offsets = [0, 24], sizes = [22, 8], strides = [1, 1]} : vector<22x32xf32> to vector<22x8xf32>
    %346 = arith.negf %345 : vector<22x8xf32>
    %347 = math.exp %346 : vector<22x8xf32>
    %cst_145 = arith.constant 1.000000e+00 : f32
    %348 = vector.broadcast %cst_145 : f32 to vector<22x8xf32>
    %349 = arith.addf %348, %347 : vector<22x8xf32>
    %350 = arith.divf %348, %349 : vector<22x8xf32>
    %351 = arith.mulf %342, %328 : vector<22x8xf32>
    %352 = arith.mulf %336, %344 : vector<22x8xf32>
    %353 = arith.addf %351, %352 : vector<22x8xf32>
    %354 = math.tanh %353 : vector<22x8xf32>
    %355 = arith.mulf %350, %354 : vector<22x8xf32>
    %356 = vector.shape_cast %330 : vector<22x1xi1> to vector<22x1xi1>
    %357 = vector.broadcast %356 : vector<22x1xi1> to vector<22x8xi1>
    %358 = arith.select %357, %355, %327 : vector<22x8xi1>, vector<22x8xf32>
    %359 = vector.shape_cast %330 : vector<22x1xi1> to vector<22x1xi1>
    %360 = vector.broadcast %359 : vector<22x1xi1> to vector<22x8xi1>
    %361 = arith.select %360, %353, %328 : vector<22x8xi1>, vector<22x8xf32>
    %cst_146 = arith.constant 0.000000e+00 : f32
    %362 = vector.broadcast %cst_146 : f32 to vector<22x8xf32>
    %363 = vector.shape_cast %330 : vector<22x1xi1> to vector<22x1xi1>
    %364 = vector.broadcast %363 : vector<22x1xi1> to vector<22x8xi1>
    %365 = arith.select %364, %355, %362 : vector<22x8xi1>, vector<22x8xf32>
    %c0_147 = arith.constant 0 : index
    %c0_148 = arith.constant 0 : index
    %366 = vector.load %arg9[%c0_147, %c0_148] : memref<22x8xf32, #tpu.memory_space<vmem>>, vector<22x8xf32>
    tpu.vector_store %arg9[%c0_147, %c0_148], %358 {strides = array<i32>} : memref<22x8xf32, #tpu.memory_space<vmem>>, vector<22x8xf32>,
    %c0_149 = arith.constant 0 : index
    %c0_150 = arith.constant 0 : index
    %367 = vector.load %arg10[%c0_149, %c0_150] : memref<22x8xf32, #tpu.memory_space<vmem>>, vector<22x8xf32>
    tpu.vector_store %arg10[%c0_149, %c0_150], %361 {strides = array<i32>} : memref<22x8xf32, #tpu.memory_space<vmem>>, vector<22x8xf32>,
    %368 = arith.index_cast %c3_i32_132 : i32 to index
    %c0_151 = arith.constant 0 : index
    %c0_152 = arith.constant 0 : index
    %369 = vector.load %arg5[%368, %c0_151, %c0_152] : memref<4x22x8xf32, #tpu.memory_space<vmem>>, vector<1x22x8xf32>
    %370 = vector.shape_cast %369 : vector<1x22x8xf32> to vector<22x8xf32>
    %371 = vector.shape_cast %365 : vector<22x8xf32> to vector<1x22x8xf32>
    tpu.vector_store %arg5[%368, %c0_151, %c0_152], %371 {strides = array<i32>} : memref<4x22x8xf32, #tpu.memory_space<vmem>>, vector<1x22x8xf32>,
    %372 = arith.index_cast %320 : i32 to index
    %c0_153 = arith.constant 0 : index
    %c0_154 = arith.constant 0 : index
    %373 = vector.load %arg1[%372, %c0_153, %c0_154] : memref<4x22x32xf32, #tpu.memory_space<vmem>>, vector<1x22x32xf32>
    %374 = vector.shape_cast %373 : vector<1x22x32xf32> to vector<22x32xf32>
    %c0_155 = arith.constant 0 : index
    %c0_156 = arith.constant 0 : index
    %375 = vector.load %arg11[%c0_155, %c0_156] : memref<22x8xf32, #tpu.memory_space<vmem>>, vector<22x8xf32>
    %cst_157 = arith.constant dense<0.000000e+00> : vector<22x32xf32>
    %376 = tpu.matmul %375, %9, %cst_157 {dimension_numbers = #tpu.dot_dimension_numbers<[1], [0], [0], [1], [0, 0, 1, 1], [], []>} : vector<22x8xf32>, vector<8x32xf32>, vector<22x32xf32> -> vector<22x32xf32>
    %377 = arith.addf %374, %376 : vector<22x32xf32>
    %c0_158 = arith.constant 0 : index
    %c0_159 = arith.constant 0 : index
    %378 = vector.load %arg11[%c0_158, %c0_159] : memref<22x8xf32, #tpu.memory_space<vmem>>, vector<22x8xf32>
    %c0_160 = arith.constant 0 : index
    %c0_161 = arith.constant 0 : index
    %379 = vector.load %arg12[%c0_160, %c0_161] : memref<22x8xf32, #tpu.memory_space<vmem>>, vector<22x8xf32>
    %380 = vector.broadcast %320 : i32 to vector<22x1xi32>
    %381 = arith.cmpi slt, %380, %10 : vector<22x1xi32>
    %382 = vector.extract_strided_slice %377 {offsets = [0, 0], sizes = [22, 8], strides = [1, 1]} : vector<22x32xf32> to vector<22x8xf32>
    %383 = arith.negf %382 : vector<22x8xf32>
    %384 = math.exp %383 : vector<22x8xf32>
    %cst_162 = arith.constant 1.000000e+00 : f32
    %385 = vector.broadcast %cst_162 : f32 to vector<22x8xf32>
    %386 = arith.addf %385, %384 : vector<22x8xf32>
    %387 = arith.divf %385, %386 : vector<22x8xf32>
    %388 = vector.extract_strided_slice %377 {offsets = [0, 8], sizes = [22, 8], strides = [1, 1]} : vector<22x32xf32> to vector<22x8xf32>
    %389 = arith.negf %388 : vector<22x8xf32>
    %390 = math.exp %389 : vector<22x8xf32>
    %cst_163 = arith.constant 1.000000e+00 : f32
    %391 = vector.broadcast %cst_163 : f32 to vector<22x8xf32>
    %392 = arith.addf %391, %390 : vector<22x8xf32>
    %393 = arith.divf %391, %392 : vector<22x8xf32>
    %394 = vector.extract_strided_slice %377 {offsets = [0, 16], sizes = [22, 8], strides = [1, 1]} : vector<22x32xf32> to vector<22x8xf32>
    %395 = math.tanh %394 : vector<22x8xf32>
    %396 = vector.extract_strided_slice %377 {offsets = [0, 24], sizes = [22, 8], strides = [1, 1]} : vector<22x32xf32> to vector<22x8xf32>
    %397 = arith.negf %396 : vector<22x8xf32>
    %398 = math.exp %397 : vector<22x8xf32>
    %cst_164 = arith.constant 1.000000e+00 : f32
    %399 = vector.broadcast %cst_164 : f32 to vector<22x8xf32>
    %400 = arith.addf %399, %398 : vector<22x8xf32>
    %401 = arith.divf %399, %400 : vector<22x8xf32>
    %402 = arith.mulf %393, %379 : vector<22x8xf32>
    %403 = arith.mulf %387, %395 : vector<22x8xf32>
    %404 = arith.addf %402, %403 : vector<22x8xf32>
    %405 = math.tanh %404 : vector<22x8xf32>
    %406 = arith.mulf %401, %405 : vector<22x8xf32>
    %407 = vector.shape_cast %381 : vector<22x1xi1> to vector<22x1xi1>
    %408 = vector.broadcast %407 : vector<22x1xi1> to vector<22x8xi1>
    %409 = arith.select %408, %406, %378 : vector<22x8xi1>, vector<22x8xf32>
    %410 = vector.shape_cast %381 : vector<22x1xi1> to vector<22x1xi1>
    %411 = vector.broadcast %410 : vector<22x1xi1> to vector<22x8xi1>
    %412 = arith.select %411, %404, %379 : vector<22x8xi1>, vector<22x8xf32>
    %cst_165 = arith.constant 0.000000e+00 : f32
    %413 = vector.broadcast %cst_165 : f32 to vector<22x8xf32>
    %414 = vector.shape_cast %381 : vector<22x1xi1> to vector<22x1xi1>
    %415 = vector.broadcast %414 : vector<22x1xi1> to vector<22x8xi1>
    %416 = arith.select %415, %406, %413 : vector<22x8xi1>, vector<22x8xf32>
    %c0_166 = arith.constant 0 : index
    %c0_167 = arith.constant 0 : index
    %417 = vector.load %arg11[%c0_166, %c0_167] : memref<22x8xf32, #tpu.memory_space<vmem>>, vector<22x8xf32>
    tpu.vector_store %arg11[%c0_166, %c0_167], %409 {strides = array<i32>} : memref<22x8xf32, #tpu.memory_space<vmem>>, vector<22x8xf32>,
    %c0_168 = arith.constant 0 : index
    %c0_169 = arith.constant 0 : index
    %418 = vector.load %arg12[%c0_168, %c0_169] : memref<22x8xf32, #tpu.memory_space<vmem>>, vector<22x8xf32>
    tpu.vector_store %arg12[%c0_168, %c0_169], %412 {strides = array<i32>} : memref<22x8xf32, #tpu.memory_space<vmem>>, vector<22x8xf32>,
    %419 = arith.index_cast %320 : i32 to index
    %c0_170 = arith.constant 0 : index
    %c0_171 = arith.constant 0 : index
    %420 = vector.load %arg6[%419, %c0_170, %c0_171] : memref<4x22x8xf32, #tpu.memory_space<vmem>>, vector<1x22x8xf32>
    %421 = vector.shape_cast %420 : vector<1x22x8xf32> to vector<22x8xf32>
    %422 = vector.shape_cast %416 : vector<22x8xf32> to vector<1x22x8xf32>
    tpu.vector_store %arg6[%419, %c0_170, %c0_171], %422 {strides = array<i32>} : memref<4x22x8xf32, #tpu.memory_space<vmem>>, vector<1x22x8xf32>,
    %c4_i32 = arith.constant 4 : i32
    %c0_172 = arith.constant 0 : index
    %c0_173 = arith.constant 0 : index
    %423 = vector.load %arg9[%c0_172, %c0_173] : memref<22x8xf32, #tpu.memory_space<vmem>>, vector<22x8xf32>
    %c0_174 = arith.constant 0 : index
    %c0_175 = arith.constant 0 : index
    %424 = vector.load %arg7[%c0_174, %c0_175] : memref<22x8xf32, #tpu.memory_space<vmem>>, vector<22x8xf32>
    tpu.vector_store %arg7[%c0_174, %c0_175], %423 {strides = array<i32>} : memref<22x8xf32, #tpu.memory_space<vmem>>, vector<22x8xf32>,
    %c0_176 = arith.constant 0 : index
    %c0_177 = arith.constant 0 : index
    %425 = vector.load %arg11[%c0_176, %c0_177] : memref<22x8xf32, #tpu.memory_space<vmem>>, vector<22x8xf32>
    %c0_178 = arith.constant 0 : index
    %c0_179 = arith.constant 0 : index
    %426 = vector.load %arg8[%c0_178, %c0_179] : memref<22x8xf32, #tpu.memory_space<vmem>>, vector<22x8xf32>
    tpu.vector_store %arg8[%c0_178, %c0_179], %425 {strides = array<i32>} : memref<22x8xf32, #tpu.memory_space<vmem>>, vector<22x8xf32>,
    return
  }
}

</mosaic_0001>

<llo_original>
// kernel: tpu_custom_call.1
$region0: #{tpu_custom_call.1}
  #allocation0 [shape = 'u32[]', space=smem, size = 0x4, offset = 0x4, fixed_abs, tag = 'smem constant byte address 0x4 - core index']
  #allocation1 [shape = 'u32[144,128]{1,0:T(1,128)}', space=vmem, size = 0x12000, scoped, tag = 'internal scratch']
  #allocation2 [shape = 'f32[22,8]{1,0:T(8,128)}', space=vmem, size = 0x3000, scoped, tag = 'scratch operand']
  #allocation3 [shape = 'f32[22,8]{1,0:T(8,128)}', space=vmem, size = 0x3000, scoped, tag = 'scratch operand']
  #allocation4 [shape = 'f32[22,8]{1,0:T(8,128)}', space=vmem, size = 0x3000, scoped, tag = 'scratch operand']
  #allocation5 [shape = 'f32[22,8]{1,0:T(8,128)}', space=vmem, size = 0x3000, scoped, tag = 'scratch operand']
  %s0 = inlined_call_operand.vmem [shape: f32[4,22,32], index: 0, kind: input, shape index: {}]
  %s1 = inlined_call_operand.vmem [shape: f32[4,22,32], index: 1, kind: input, shape index: {}]
  %s2 = inlined_call_operand.vmem [shape: s32[22,1], index: 2, kind: input, shape index: {}]
  %s3 = inlined_call_operand.vmem [shape: f32[8,32], index: 3, kind: input, shape index: {}]
  %s4 = inlined_call_operand.vmem [shape: f32[8,32], index: 4, kind: input, shape index: {}]
  %s5 = inlined_call_operand.vmem [shape: f32[4,22,8], index: 5, kind: output, shape index: {0}]
  %s6 = inlined_call_operand.vmem [shape: f32[4,22,8], index: 6, kind: output, shape index: {1}]
  %s7 = inlined_call_operand.vmem [shape: f32[22,8], index: 7, kind: output, shape index: {2}]
  %s8 = inlined_call_operand.vmem [shape: f32[22,8], index: 8, kind: output, shape index: {3}]
  %9 = xla_tuple %s5, %s6, %s7, %s8
  %s10 = sld [smem:[#allocation0]]
  $region54: #{tpu_custom_call.1} parent=0
    _
  %s12 = ssub.s32 1, %s10
  %s13 = scalar_select 0, %s12, %s10
  // Predicated region
  $region2: #{tpu_custom_call.1} parent=0 // pred_check
    _
  $region3: #{tpu_custom_call.1} parent=0 // pred_check_branch
    %15 = sbr.rel (0) target = $region5
  $region4: #{tpu_custom_call.1} parent=0 // pred_region
    _
  $region5: #{tpu_custom_call.1} parent=0 // pred_fallthru
    _
  // Predicated region
  $region6: #{tpu_custom_call.1} parent=0 // pred_check
    _
  $region7: #{tpu_custom_call.1} parent=0 // pred_check_branch
    %17 = sbr.rel (0) target = $region9
  $region8: #{tpu_custom_call.1} parent=0 // pred_region
    _
  $region9: #{tpu_custom_call.1} parent=0 // pred_fallthru
    _
  // Predicated region
  $region10: #{tpu_custom_call.1} parent=0 // pred_check
    _
  $region11: #{tpu_custom_call.1} parent=0 // pred_check_branch
    %19 = sbr.rel (0) target = $region13
  $region12: #{tpu_custom_call.1} parent=0 // pred_region
    _
  $region13: #{tpu_custom_call.1} parent=0 // pred_fallthru
    _
  // Predicated region
  $region14: #{tpu_custom_call.1} parent=0 // pred_check
    _
  $region15: #{tpu_custom_call.1} parent=0 // pred_check_branch
    %21 = sbr.rel (0) target = $region17
  $region16: #{tpu_custom_call.1} parent=0 // pred_region
    _
  $region17: #{tpu_custom_call.1} parent=0 // pred_fallthru
    _
  // Predicated region
  $region18: #{tpu_custom_call.1} parent=0 // pred_check
    _
  $region19: #{tpu_custom_call.1} parent=0 // pred_check_branch
    %23 = sbr.rel (0) target = $region21
  $region20: #{tpu_custom_call.1} parent=0 // pred_region
    _
  $region21: #{tpu_custom_call.1} parent=0 // pred_fallthru
    _
  %vm24 = vcmask 64512
  %25 = vst.msk [vmem:[#allocation2] sm:$0xff] %vm24, 0.0
  %26 = vst.msk [vmem:[#allocation2 + $0x8] sm:$0xff] %vm24, 0.0
  %vm27 = vcmask 62464
  %28 = vst.msk [vmem:[#allocation2 + $0x10] sm:$0x3f] %vm27, 0.0
  %29 = vst.msk [vmem:[#allocation3] sm:$0xff] %vm24, 0.0
  %30 = vst.msk [vmem:[#allocation3 + $0x8] sm:$0xff] %vm24, 0.0
  %31 = vst.msk [vmem:[#allocation3 + $0x10] sm:$0x3f] %vm27, 0.0
  %32 = vst.msk [vmem:[#allocation4] sm:$0xff] %vm24, 0.0
  %33 = vst.msk [vmem:[#allocation4 + $0x8] sm:$0xff] %vm24, 0.0
  %34 = vst.msk [vmem:[#allocation4 + $0x10] sm:$0x3f] %vm27, 0.0
  %35 = vst.msk [vmem:[#allocation5] sm:$0xff] %vm24, 0.0
  %36 = vst.msk [vmem:[#allocation5 + $0x8] sm:$0xff] %vm24, 0.0
  %37 = vst.msk [vmem:[#allocation5 + $0x10] sm:$0x3f] %vm27, 0.0
  %v38 = vld [vmem:[%s3] sm:$0xff]
  %v39 = vld [vmem:[%s4] sm:$0xff]
  %v40 = vld [vmem:[%s2] sm:$0xff]
  %v41 = vld [vmem:[%s2 + $0x8] sm:$0xff]
  %v42 = vld [vmem:[%s2 + $0x10] sm:$0x3f]
  %v43 = vld [vmem:[%s0] sm:$0xff]
  %v44 = vld [vmem:[%s0 + $0x8] sm:$0xff]
  %v45 = vld [vmem:[%s0 + $0x10] sm:$0x3f]
  %v46 = vld [vmem:[#allocation2] sm:$0xff]
  %v47 = vld [vmem:[#allocation2 + $0x8] sm:$0xff]
  %v48 = vld [vmem:[#allocation2 + $0x10] sm:$0x3f]
  %v50 = vsel %vm24, %v46, 0
  %v53 = vsel %vm24, %v47, 0
  %v56 = vsel %vm24, %v48, 0
  %58 = vmatprep.subr.mxu0 0.0
  %59 = vmatpush1.msra.mxu0 %v38
  %60 = vmatprep.subr.mxu0 0.0
  %61 = vmatpush1.msra.mxu0 0.0
  %62 = vmatprep.subr.mxu0 0.0
  %63 = vmatpush1.msra.mxu0 0.0
  %64 = vmatprep.subr.mxu0 0.0
  %65 = vmatpush1.msra.mxu0 0.0
  %66 = vmatprep.subr.mxu0 0.0
  %67 = vmatpush1.msra.mxu0 0.0
  %68 = vmatprep.subr.mxu0 0.0
  %69 = vmatpush1.msra.mxu0 0.0
  %70 = vmatprep.subr.mxu0 0.0
  %71 = vmatpush1.msra.mxu0 0.0
  %72 = vmatprep.subr.mxu0 0.0
  %73 = vmatpush1.msra.mxu0 0.0
  %74 = vmatprep.subr.mxu0 0.0
  %75 = vmatpush1.msra.mxu0 0.0
  %76 = vmatprep.subr.mxu0 0.0
  %77 = vmatpush1.msra.mxu0 0.0
  %78 = vmatprep.subr.mxu0 0.0
  %79 = vmatpush1.msra.mxu0 0.0
  %80 = vmatprep.subr.mxu0 0.0
  %81 = vmatpush1.msra.mxu0 0.0
  %82 = vmatprep.subr.mxu0 0.0
  %83 = vmatpush1.msra.mxu0 0.0
  %84 = vmatprep.subr.mxu0 0.0
  %85 = vmatpush1.msra.mxu0 0.0
  %86 = vmatprep.subr.mxu0 0.0
  %87 = vmatpush1.msra.mxu0 0.0
  %88 = vmatprep.subr.mxu0 0.0
  %89 = vmatpush1.msra.mxu0 0.0
  %90 = vmatprep.subr.mxu0 0.0
  %91 = vmatpush1.msra.mxu0 0.0
  %92 = vmatprep.subr.mxu0 0.0
  %93 = vmatpush1.msra.mxu0 0.0
  %94 = vmatprep.subr.mxu0 0.0
  %95 = vmatpush1.msra.mxu0 0.0
  %96 = vmatprep.subr.mxu0 0.0
  %97 = vmatpush1.msra.mxu0 0.0
  %98 = vmatprep.subr.mxu0 0.0
  %99 = vmatpush1.msra.mxu0 0.0
  %100 = vmatprep.subr.mxu0 0.0
  %101 = vmatpush1.msra.mxu0 0.0
  %102 = vmatprep.subr.mxu0 0.0
  %103 = vmatpush1.msra.mxu0 0.0
  %104 = vmatprep.subr.mxu0 0.0
  %105 = vmatpush1.msra.mxu0 0.0
  %106 = vmatprep.subr.mxu0 0.0
  %107 = vmatpush1.msra.mxu0 0.0
  %108 = vmatprep.subr.mxu0 0.0
  %109 = vmatpush1.msra.mxu0 0.0
  %110 = vmatprep.subr.mxu0 0.0
  %111 = vmatpush1.msra.mxu0 0.0
  %112 = vmatprep.subr.mxu0 0.0
  %113 = vmatpush1.msra.mxu0 0.0
  %114 = vmatprep.subr.mxu0 0.0
  %115 = vmatpush1.msra.mxu0 0.0
  %116 = vmatprep.subr.mxu0 0.0
  %117 = vmatpush1.msra.mxu0 0.0
  %118 = vmatprep.subr.mxu0 0.0
  %119 = vmatpush1.msra.mxu0 0.0
  %120 = vmatprep.subr.mxu0 0.0
  %121 = vmatpush1.msra.mxu0 0.0
  %122 = vmatprep.mubr.f32.mxu0 0.0
  %123 = vmatmul.mubr.f32.gmra.mrb[0].mxu0 %v50
  %v124 = vpop.f32.mrb[0].mxu0
  %v125 = vadd.f32 0.0, %v124
  %v126 = vpop.f32.mrb[0].mxu0
  %127 = vmatprep.mubr.f32.mxu0 0.0
  %128 = vmatmul.mubr.f32.gmra.mrb[0].mxu0 %v53
  %v129 = vpop.f32.mrb[0].mxu0
  %v130 = vadd.f32 0.0, %v129
  %v131 = vpop.f32.mrb[0].mxu0
  %132 = vmatprep.mubr.f32.mxu0 0.0
  %133 = vmatmul.mubr.f32.gmra.mrb[0].mxu0 %v56
  %v134 = vpop.f32.mrb[0].mxu0
  %v135 = vadd.f32 0.0, %v134
  %v136 = vpop.f32.mrb[0].mxu0
  %137 = vdwg.mxu0
  %v138 = vadd.f32 %v43, %v125
  %v139 = vadd.f32 %v44, %v130
  %v140 = vadd.f32 %v45, %v135
  %v141 = vld [vmem:[#allocation3] sm:$0xff]
  %v142 = vld [vmem:[#allocation3 + $0x8] sm:$0xff]
  %v143 = vld [vmem:[#allocation3 + $0x10] sm:$0x3f]
  %vm144 = vcmp.gt.s32.totalorder %v40, 0
  %vm145 = vcmp.gt.s32.totalorder %v41, 0
  %vm146 = vcmp.gt.s32.totalorder %v42, 0
  %v147 = vxor.u32 %v138, 2147483648
  %v148 = vxor.u32 %v139, 2147483648
  %v149 = vxor.u32 %v140, 2147483648
  %v150 = vmul.f32 %v147, 1.442695
  %v151 = vpow.pop %v150
  %v152 = vmul.f32 %v148, 1.442695
  %v153 = vpow.pop %v152
  %v154 = vmul.f32 %v149, 1.442695
  %v155 = vpow.pop %v154
  %v156 = vadd.f32 %v151, 1.0
  %v157 = vadd.f32 %v153, 1.0
  %v158 = vadd.f32 %v155, 1.0
  %v159 = vrcp.pop %v156
  %v160 = vmul.f32 1.0, %v159
  %v161 = vrcp.pop %v157
  %v162 = vmul.f32 1.0, %v161
  %v163 = vrcp.pop %v158
  %v164 = vmul.f32 1.0, %v163
  %v165 = vtanh.pop %v138
  %v166 = vtanh.pop %v139
  %v167 = vtanh.pop %v140
  %171 = vrot.lane.b32.xlu0 %v141, 8
  %v172 = vpop.permute.xlu0 %171
  %173 = vrot.lane.b32.xlu0 %v142, 8
  %v174 = vpop.permute.xlu0 %173
  %175 = vrot.lane.b32.xlu0 %v143, 8
  %v176 = vpop.permute.xlu0 %175
  %v180 = vmul.f32 %v160, %v172
  %v181 = vmul.f32 %v162, %v174
  %v182 = vmul.f32 %v164, %v176
  %186 = vrot.lane.b32.xlu0 %v165, 112
  %v187 = vpop.permute.xlu0 %186
  %188 = vrot.lane.b32.xlu0 %v166, 112
  %v189 = vpop.permute.xlu0 %188
  %190 = vrot.lane.b32.xlu0 %v167, 112
  %v191 = vpop.permute.xlu0 %190
  %v195 = vmul.f32 %v160, %v187
  %v196 = vmul.f32 %v162, %v189
  %v197 = vmul.f32 %v164, %v191
  %201 = vrot.lane.b32.xlu0 %v195, 8
  %v202 = vpop.permute.xlu0 %201
  %203 = vrot.lane.b32.xlu0 %v196, 8
  %v204 = vpop.permute.xlu0 %203
  %205 = vrot.lane.b32.xlu0 %v197, 8
  %v206 = vpop.permute.xlu0 %205
  %v210 = vadd.f32 %v180, %v202
  %v211 = vadd.f32 %v181, %v204
  %v212 = vadd.f32 %v182, %v206
  %v213 = vtanh.pop %v210
  %v214 = vtanh.pop %v211
  %v215 = vtanh.pop %v212
  %219 = vrot.lane.b32.xlu0 %v213, 16
  %v220 = vpop.permute.xlu0 %219
  %221 = vrot.lane.b32.xlu0 %v214, 16
  %v222 = vpop.permute.xlu0 %221
  %223 = vrot.lane.b32.xlu0 %v215, 16
  %v224 = vpop.permute.xlu0 %223
  %v228 = vmul.f32 %v160, %v220
  %v229 = vmul.f32 %v162, %v222
  %v230 = vmul.f32 %v164, %v224
  %v231 = vsel %vm144, 1, 0
  %v232 = vsel %vm145, 1, 0
  %v233 = vsel %vm146, 1, 0
  %234 = vset.pattern.permute.xlu0 0
  %235 = vperm.xlu0 %234, %v231
  %v236 = vpop.permute.xlu0 %235
  %237 = vset.pattern.permute.xlu0 0
  %238 = vperm.xlu0 %237, %v232
  %v239 = vpop.permute.xlu0 %238
  %240 = vset.pattern.permute.xlu0 0
  %241 = vperm.xlu0 %240, %v233
  %v242 = vpop.permute.xlu0 %241
  %vm243 = vcmp.eq.s32.totalorder %v236, 1
  %vm244 = vcmp.eq.s32.totalorder %v239, 1
  %vm245 = vcmp.eq.s32.totalorder %v242, 1
  %246 = vrot.lane.b32.xlu0 %v46, 24
  %v247 = vpop.permute.xlu0 %246
  %248 = vrot.lane.b32.xlu0 %v47, 24
  %v249 = vpop.permute.xlu0 %248
  %250 = vrot.lane.b32.xlu0 %v48, 24
  %v251 = vpop.permute.xlu0 %250
  %v255 = vsel %vm243, %v228, %v247
  %v256 = vsel %vm244, %v229, %v249
  %v257 = vsel %vm245, %v230, %v251
  %v258 = vsel %vm243, %v210, %v172
  %v259 = vsel %vm244, %v211, %v174
  %v260 = vsel %vm245, %v212, %v176
  %v261 = vsel %vm243, %v228, 0.0
  %v262 = vsel %vm244, %v229, 0.0
  %v263 = vsel %vm245, %v230, 0.0
  %267 = vrot.lane.b32.xlu0 %v255, 104
  %v268 = vpop.permute.xlu0 %267
  %269 = vrot.lane.b32.xlu0 %v256, 104
  %v270 = vpop.permute.xlu0 %269
  %271 = vrot.lane.b32.xlu0 %v257, 104
  %v272 = vpop.permute.xlu0 %271
  %276 = vst.msk [vmem:[#allocation2] sm:$0xff] %vm24, %v268
  %277 = vst.msk [vmem:[#allocation2 + $0x8] sm:$0xff] %vm24, %v270
  %278 = vst.msk [vmem:[#allocation2 + $0x10] sm:$0x3f] %vm27, %v272
  %282 = vrot.lane.b32.xlu0 %v258, 120
  %v283 = vpop.permute.xlu0 %282
  %284 = vrot.lane.b32.xlu0 %v259, 120
  %v285 = vpop.permute.xlu0 %284
  %286 = vrot.lane.b32.xlu0 %v260, 120
  %v287 = vpop.permute.xlu0 %286
  %291 = vst.msk [vmem:[#allocation3] sm:$0xff] %vm24, %v283
  %292 = vst.msk [vmem:[#allocation3 + $0x8] sm:$0xff] %vm24, %v285
  %293 = vst.msk [vmem:[#allocation3 + $0x10] sm:$0x3f] %vm27, %v287
  %297 = vrot.lane.b32.xlu0 %v261, 104
  %v298 = vpop.permute.xlu0 %297
  %299 = vrot.lane.b32.xlu0 %v262, 104
  %v300 = vpop.permute.xlu0 %299
  %301 = vrot.lane.b32.xlu0 %v263, 104
  %v302 = vpop.permute.xlu0 %301
  %306 = vst.msk [vmem:[%s5] sm:$0xff] %vm24, %v298
  %307 = vst.msk [vmem:[%s5 + $0x8] sm:$0xff] %vm24, %v300
  %308 = vst.msk [vmem:[%s5 + $0x10] sm:$0x3f] %vm27, %v302
  %s309 = scalar_lea.vmem %s1, 72
  %v310 = vld [vmem:[%s309] sm:$0xff]
  %v311 = vld [vmem:[%s309 + $0x8] sm:$0xff]
  %v312 = vld [vmem:[%s309 + $0x10] sm:$0x3f]
  %v313 = vld [vmem:[#allocation4] sm:$0xff]
  %v314 = vld [vmem:[#allocation4 + $0x8] sm:$0xff]
  %v315 = vld [vmem:[#allocation4 + $0x10] sm:$0x3f]
  %v317 = vsel %vm24, %v313, 0
  %v320 = vsel %vm24, %v314, 0
  %v323 = vsel %vm24, %v315, 0
  %325 = vmatprep.subr.mxu0 0.0
  %326 = vmatpush1.msra.mxu0 %v39
  %327 = vmatprep.subr.mxu0 0.0
  %328 = vmatpush1.msra.mxu0 0.0
  %329 = vmatprep.subr.mxu0 0.0
  %330 = vmatpush1.msra.mxu0 0.0
  %331 = vmatprep.subr.mxu0 0.0
  %332 = vmatpush1.msra.mxu0 0.0
  %333 = vmatprep.subr.mxu0 0.0
  %334 = vmatpush1.msra.mxu0 0.0
  %335 = vmatprep.subr.mxu0 0.0
  %336 = vmatpush1.msra.mxu0 0.0
  %337 = vmatprep.subr.mxu0 0.0
  %338 = vmatpush1.msra.mxu0 0.0
  %339 = vmatprep.subr.mxu0 0.0
  %340 = vmatpush1.msra.mxu0 0.0
  %341 = vmatprep.subr.mxu0 0.0
  %342 = vmatpush1.msra.mxu0 0.0
  %343 = vmatprep.subr.mxu0 0.0
  %344 = vmatpush1.msra.mxu0 0.0
  %345 = vmatprep.subr.mxu0 0.0
  %346 = vmatpush1.msra.mxu0 0.0
  %347 = vmatprep.subr.mxu0 0.0
  %348 = vmatpush1.msra.mxu0 0.0
  %349 = vmatprep.subr.mxu0 0.0
  %350 = vmatpush1.msra.mxu0 0.0
  %351 = vmatprep.subr.mxu0 0.0
  %352 = vmatpush1.msra.mxu0 0.0
  %353 = vmatprep.subr.mxu0 0.0
  %354 = vmatpush1.msra.mxu0 0.0
  %355 = vmatprep.subr.mxu0 0.0
  %356 = vmatpush1.msra.mxu0 0.0
  %357 = vmatprep.subr.mxu0 0.0
  %358 = vmatpush1.msra.mxu0 0.0
  %359 = vmatprep.subr.mxu0 0.0
  %360 = vmatpush1.msra.mxu0 0.0
  %361 = vmatprep.subr.mxu0 0.0
  %362 = vmatpush1.msra.mxu0 0.0
  %363 = vmatprep.subr.mxu0 0.0
  %364 = vmatpush1.msra.mxu0 0.0
  %365 = vmatprep.subr.mxu0 0.0
  %366 = vmatpush1.msra.mxu0 0.0
  %367 = vmatprep.subr.mxu0 0.0
  %368 = vmatpush1.msra.mxu0 0.0
  %369 = vmatprep.subr.mxu0 0.0
  %370 = vmatpush1.msra.mxu0 0.0
  %371 = vmatprep.subr.mxu0 0.0
  %372 = vmatpush1.msra.mxu0 0.0
  %373 = vmatprep.subr.mxu0 0.0
  %374 = vmatpush1.msra.mxu0 0.0
  %375 = vmatprep.subr.mxu0 0.0
  %376 = vmatpush1.msra.mxu0 0.0
  %377 = vmatprep.subr.mxu0 0.0
  %378 = vmatpush1.msra.mxu0 0.0
  %379 = vmatprep.subr.mxu0 0.0
  %380 = vmatpush1.msra.mxu0 0.0
  %381 = vmatprep.subr.mxu0 0.0
  %382 = vmatpush1.msra.mxu0 0.0
  %383 = vmatprep.subr.mxu0 0.0
  %384 = vmatpush1.msra.mxu0 0.0
  %385 = vmatprep.subr.mxu0 0.0
  %386 = vmatpush1.msra.mxu0 0.0
  %387 = vmatprep.subr.mxu0 0.0
  %388 = vmatpush1.msra.mxu0 0.0
  %389 = vmatprep.mubr.f32.mxu0 0.0
  %390 = vmatmul.mubr.f32.gmra.mrb[0].mxu0 %v317
  %v391 = vpop.f32.mrb[0].mxu0
  %v392 = vadd.f32 0.0, %v391
  %v393 = vpop.f32.mrb[0].mxu0
  %394 = vmatprep.mubr.f32.mxu0 0.0
  %395 = vmatmul.mubr.f32.gmra.mrb[0].mxu0 %v320
  %v396 = vpop.f32.mrb[0].mxu0
  %v397 = vadd.f32 0.0, %v396
  %v398 = vpop.f32.mrb[0].mxu0
  %399 = vmatprep.mubr.f32.mxu0 0.0
  %400 = vmatmul.mubr.f32.gmra.mrb[0].mxu0 %v323
  %v401 = vpop.f32.mrb[0].mxu0
  %v402 = vadd.f32 0.0, %v401
  %v403 = vpop.f32.mrb[0].mxu0
  %404 = vdwg.mxu0
  %v405 = vadd.f32 %v310, %v392
  %v406 = vadd.f32 %v311, %v397
  %v407 = vadd.f32 %v312, %v402
  %v408 = vld [vmem:[#allocation5] sm:$0xff]
  %v409 = vld [vmem:[#allocation5 + $0x8] sm:$0xff]
  %v410 = vld [vmem:[#allocation5 + $0x10] sm:$0x3f]
  %vm411 = vcmp.gt.s32.totalorder %v40, 3
  %vm412 = vcmp.gt.s32.totalorder %v41, 3
  %vm413 = vcmp.gt.s32.totalorder %v42, 3
  %v414 = vxor.u32 %v405, 2147483648
  %v415 = vxor.u32 %v406, 2147483648
  %v416 = vxor.u32 %v407, 2147483648
  %v417 = vmul.f32 %v414, 1.442695
  %v418 = vpow.pop %v417
  %v419 = vmul.f32 %v415, 1.442695
  %v420 = vpow.pop %v419
  %v421 = vmul.f32 %v416, 1.442695
  %v422 = vpow.pop %v421
  %v423 = vadd.f32 %v418, 1.0
  %v424 = vadd.f32 %v420, 1.0
  %v425 = vadd.f32 %v422, 1.0
  %v426 = vrcp.pop %v423
  %v427 = vmul.f32 1.0, %v426
  %v428 = vrcp.pop %v424
  %v429 = vmul.f32 1.0, %v428
  %v430 = vrcp.pop %v425
  %v431 = vmul.f32 1.0, %v430
  %v432 = vtanh.pop %v405
  %v433 = vtanh.pop %v406
  %v434 = vtanh.pop %v407
  %438 = vrot.lane.b32.xlu0 %v408, 8
  %v439 = vpop.permute.xlu0 %438
  %440 = vrot.lane.b32.xlu0 %v409, 8
  %v441 = vpop.permute.xlu0 %440
  %442 = vrot.lane.b32.xlu0 %v410, 8
  %v443 = vpop.permute.xlu0 %442
  %v447 = vmul.f32 %v427, %v439
  %v448 = vmul.f32 %v429, %v441
  %v449 = vmul.f32 %v431, %v443
  %453 = vrot.lane.b32.xlu0 %v432, 112
  %v454 = vpop.permute.xlu0 %453
  %455 = vrot.lane.b32.xlu0 %v433, 112
  %v456 = vpop.permute.xlu0 %455
  %457 = vrot.lane.b32.xlu0 %v434, 112
  %v458 = vpop.permute.xlu0 %457
  %v462 = vmul.f32 %v427, %v454
  %v463 = vmul.f32 %v429, %v456
  %v464 = vmul.f32 %v431, %v458
  %468 = vrot.lane.b32.xlu0 %v462, 8
  %v469 = vpop.permute.xlu0 %468
  %470 = vrot.lane.b32.xlu0 %v463, 8
  %v471 = vpop.permute.xlu0 %470
  %472 = vrot.lane.b32.xlu0 %v464, 8
  %v473 = vpop.permute.xlu0 %472
  %v477 = vadd.f32 %v447, %v469
  %v478 = vadd.f32 %v448, %v471
  %v479 = vadd.f32 %v449, %v473
  %v480 = vtanh.pop %v477
  %v481 = vtanh.pop %v478
  %v482 = vtanh.pop %v479
  %486 = vrot.lane.b32.xlu0 %v480, 16
  %v487 = vpop.permute.xlu0 %486
  %488 = vrot.lane.b32.xlu0 %v481, 16
  %v489 = vpop.permute.xlu0 %488
  %490 = vrot.lane.b32.xlu0 %v482, 16
  %v491 = vpop.permute.xlu0 %490
  %v495 = vmul.f32 %v427, %v487
  %v496 = vmul.f32 %v429, %v489
  %v497 = vmul.f32 %v431, %v491
  %v498 = vsel %vm411, 1, 0
  %v499 = vsel %vm412, 1, 0
  %v500 = vsel %vm413, 1, 0
  %501 = vset.pattern.permute.xlu0 0
  %502 = vperm.xlu0 %501, %v498
  %v503 = vpop.permute.xlu0 %502
  %504 = vset.pattern.permute.xlu0 0
  %505 = vperm.xlu0 %504, %v499
  %v506 = vpop.permute.xlu0 %505
  %507 = vset.pattern.permute.xlu0 0
  %508 = vperm.xlu0 %507, %v500
  %v509 = vpop.permute.xlu0 %508
  %vm510 = vcmp.eq.s32.totalorder %v503, 1
  %vm511 = vcmp.eq.s32.totalorder %v506, 1
  %vm512 = vcmp.eq.s32.totalorder %v509, 1
  %513 = vrot.lane.b32.xlu0 %v313, 24
  %v514 = vpop.permute.xlu0 %513
  %515 = vrot.lane.b32.xlu0 %v314, 24
  %v516 = vpop.permute.xlu0 %515
  %517 = vrot.lane.b32.xlu0 %v315, 24
  %v518 = vpop.permute.xlu0 %517
  %v522 = vsel %vm510, %v495, %v514
  %v523 = vsel %vm511, %v496, %v516
  %v524 = vsel %vm512, %v497, %v518
  %v525 = vsel %vm510, %v477, %v439
  %v526 = vsel %vm511, %v478, %v441
  %v527 = vsel %vm512, %v479, %v443
  %v528 = vsel %vm510, %v495, 0.0
  %v529 = vsel %vm511, %v496, 0.0
  %v530 = vsel %vm512, %v497, 0.0
  %534 = vrot.lane.b32.xlu0 %v522, 104
  %v535 = vpop.permute.xlu0 %534
  %536 = vrot.lane.b32.xlu0 %v523, 104
  %v537 = vpop.permute.xlu0 %536
  %538 = vrot.lane.b32.xlu0 %v524, 104
  %v539 = vpop.permute.xlu0 %538
  %543 = vst.msk [vmem:[#allocation4] sm:$0xff] %vm24, %v535
  %544 = vst.msk [vmem:[#allocation4 + $0x8] sm:$0xff] %vm24, %v537
  %545 = vst.msk [vmem:[#allocation4 + $0x10] sm:$0x3f] %vm27, %v539
  %549 = vrot.lane.b32.xlu0 %v525, 120
  %v550 = vpop.permute.xlu0 %549
  %551 = vrot.lane.b32.xlu0 %v526, 120
  %v552 = vpop.permute.xlu0 %551
  %553 = vrot.lane.b32.xlu0 %v527, 120
  %v554 = vpop.permute.xlu0 %553
  %558 = vst.msk [vmem:[#allocation5] sm:$0xff] %vm24, %v550
  %559 = vst.msk [vmem:[#allocation5 + $0x8] sm:$0xff] %vm24, %v552
  %560 = vst.msk [vmem:[#allocation5 + $0x10] sm:$0x3f] %vm27, %v554
  %564 = vrot.lane.b32.xlu0 %v528, 104
  %v565 = vpop.permute.xlu0 %564
  %566 = vrot.lane.b32.xlu0 %v529, 104
  %v567 = vpop.permute.xlu0 %566
  %568 = vrot.lane.b32.xlu0 %v530, 104
  %v569 = vpop.permute.xlu0 %568
  %s573 = scalar_lea.vmem %s6, 72
  %574 = vst.msk [vmem:[%s573] sm:$0xff] %vm24, %v565
  %575 = vst.msk [vmem:[%s573 + $0x8] sm:$0xff] %vm24, %v567
  %576 = vst.msk [vmem:[%s573 + $0x10] sm:$0x3f] %vm27, %v569
  %s577 = scalar_lea.vmem %s0, 24
  %v578 = vld [vmem:[%s577] sm:$0xff]
  %v579 = vld [vmem:[%s577 + $0x8] sm:$0xff]
  %v580 = vld [vmem:[%s577 + $0x10] sm:$0x3f]
  %v581 = vld [vmem:[#allocation2] sm:$0xff]
  %v582 = vld [vmem:[#allocation2 + $0x8] sm:$0xff]
  %v583 = vld [vmem:[#allocation2 + $0x10] sm:$0x3f]
  %v585 = vsel %vm24, %v581, 0
  %v588 = vsel %vm24, %v582, 0
  %v591 = vsel %vm24, %v583, 0
  %593 = vmatprep.subr.mxu0 0.0
  %594 = vmatpush1.msra.mxu0 %v38
  %595 = vmatprep.subr.mxu0 0.0
  %596 = vmatpush1.msra.mxu0 0.0
  %597 = vmatprep.subr.mxu0 0.0
  %598 = vmatpush1.msra.mxu0 0.0
  %599 = vmatprep.subr.mxu0 0.0
  %600 = vmatpush1.msra.mxu0 0.0
  %601 = vmatprep.subr.mxu0 0.0
  %602 = vmatpush1.msra.mxu0 0.0
  %603 = vmatprep.subr.mxu0 0.0
  %604 = vmatpush1.msra.mxu0 0.0
  %605 = vmatprep.subr.mxu0 0.0
  %606 = vmatpush1.msra.mxu0 0.0
  %607 = vmatprep.subr.mxu0 0.0
  %608 = vmatpush1.msra.mxu0 0.0
  %609 = vmatprep.subr.mxu0 0.0
  %610 = vmatpush1.msra.mxu0 0.0
  %611 = vmatprep.subr.mxu0 0.0
  %612 = vmatpush1.msra.mxu0 0.0
  %613 = vmatprep.subr.mxu0 0.0
  %614 = vmatpush1.msra.mxu0 0.0
  %615 = vmatprep.subr.mxu0 0.0
  %616 = vmatpush1.msra.mxu0 0.0
  %617 = vmatprep.subr.mxu0 0.0
  %618 = vmatpush1.msra.mxu0 0.0
  %619 = vmatprep.subr.mxu0 0.0
  %620 = vmatpush1.msra.mxu0 0.0
  %621 = vmatprep.subr.mxu0 0.0
  %622 = vmatpush1.msra.mxu0 0.0
  %623 = vmatprep.subr.mxu0 0.0
  %624 = vmatpush1.msra.mxu0 0.0
  %625 = vmatprep.subr.mxu0 0.0
  %626 = vmatpush1.msra.mxu0 0.0
  %627 = vmatprep.subr.mxu0 0.0
  %628 = vmatpush1.msra.mxu0 0.0
  %629 = vmatprep.subr.mxu0 0.0
  %630 = vmatpush1.msra.mxu0 0.0
  %631 = vmatprep.subr.mxu0 0.0
  %632 = vmatpush1.msra.mxu0 0.0
  %633 = vmatprep.subr.mxu0 0.0
  %634 = vmatpush1.msra.mxu0 0.0
  %635 = vmatprep.subr.mxu0 0.0
  %636 = vmatpush1.msra.mxu0 0.0
  %637 = vmatprep.subr.mxu0 0.0
  %638 = vmatpush1.msra.mxu0 0.0
  %639 = vmatprep.subr.mxu0 0.0
  %640 = vmatpush1.msra.mxu0 0.0
  %641 = vmatprep.subr.mxu0 0.0
  %642 = vmatpush1.msra.mxu0 0.0
  %643 = vmatprep.subr.mxu0 0.0
  %644 = vmatpush1.msra.mxu0 0.0
  %645 = vmatprep.subr.mxu0 0.0
  %646 = vmatpush1.msra.mxu0 0.0
  %647 = vmatprep.subr.mxu0 0.0
  %648 = vmatpush1.msra.mxu0 0.0
  %649 = vmatprep.subr.mxu0 0.0
  %650 = vmatpush1.msra.mxu0 0.0
  %651 = vmatprep.subr.mxu0 0.0
  %652 = vmatpush1.msra.mxu0 0.0
  %653 = vmatprep.subr.mxu0 0.0
  %654 = vmatpush1.msra.mxu0 0.0
  %655 = vmatprep.subr.mxu0 0.0
  %656 = vmatpush1.msra.mxu0 0.0
  %657 = vmatprep.mubr.f32.mxu0 0.0
  %658 = vmatmul.mubr.f32.gmra.mrb[0].mxu0 %v585
  %v659 = vpop.f32.mrb[0].mxu0
  %v660 = vadd.f32 0.0, %v659
  %v661 = vpop.f32.mrb[0].mxu0
  %662 = vmatprep.mubr.f32.mxu0 0.0
  %663 = vmatmul.mubr.f32.gmra.mrb[0].mxu0 %v588
  %v664 = vpop.f32.mrb[0].mxu0
  %v665 = vadd.f32 0.0, %v664
  %v666 = vpop.f32.mrb[0].mxu0
  %667 = vmatprep.mubr.f32.mxu0 0.0
  %668 = vmatmul.mubr.f32.gmra.mrb[0].mxu0 %v591
  %v669 = vpop.f32.mrb[0].mxu0
  %v670 = vadd.f32 0.0, %v669
  %v671 = vpop.f32.mrb[0].mxu0
  %672 = vdwg.mxu0
  %v673 = vadd.f32 %v578, %v660
  %v674 = vadd.f32 %v579, %v665
  %v675 = vadd.f32 %v580, %v670
  %v676 = vld [vmem:[#allocation3] sm:$0xff]
  %v677 = vld [vmem:[#allocation3 + $0x8] sm:$0xff]
  %v678 = vld [vmem:[#allocation3 + $0x10] sm:$0x3f]
  %vm679 = vcmp.gt.s32.totalorder %v40, 1
  %vm680 = vcmp.gt.s32.totalorder %v41, 1
  %vm681 = vcmp.gt.s32.totalorder %v42, 1
  %v682 = vxor.u32 %v673, 2147483648
  %v683 = vxor.u32 %v674, 2147483648
  %v684 = vxor.u32 %v675, 2147483648
  %v685 = vmul.f32 %v682, 1.442695
  %v686 = vpow.pop %v685
  %v687 = vmul.f32 %v683, 1.442695
  %v688 = vpow.pop %v687
  %v689 = vmul.f32 %v684, 1.442695
  %v690 = vpow.pop %v689
  %v691 = vadd.f32 %v686, 1.0
  %v692 = vadd.f32 %v688, 1.0
  %v693 = vadd.f32 %v690, 1.0
  %v694 = vrcp.pop %v691
  %v695 = vmul.f32 1.0, %v694
  %v696 = vrcp.pop %v692
  %v697 = vmul.f32 1.0, %v696
  %v698 = vrcp.pop %v693
  %v699 = vmul.f32 1.0, %v698
  %v700 = vtanh.pop %v673
  %v701 = vtanh.pop %v674
  %v702 = vtanh.pop %v675
  %706 = vrot.lane.b32.xlu0 %v676, 8
  %v707 = vpop.permute.xlu0 %706
  %708 = vrot.lane.b32.xlu0 %v677, 8
  %v709 = vpop.permute.xlu0 %708
  %710 = vrot.lane.b32.xlu0 %v678, 8
  %v711 = vpop.permute.xlu0 %710
  %v715 = vmul.f32 %v695, %v707
  %v716 = vmul.f32 %v697, %v709
  %v717 = vmul.f32 %v699, %v711
  %721 = vrot.lane.b32.xlu0 %v700, 112
  %v722 = vpop.permute.xlu0 %721
  %723 = vrot.lane.b32.xlu0 %v701, 112
  %v724 = vpop.permute.xlu0 %723
  %725 = vrot.lane.b32.xlu0 %v702, 112
  %v726 = vpop.permute.xlu0 %725
  %v730 = vmul.f32 %v695, %v722
  %v731 = vmul.f32 %v697, %v724
  %v732 = vmul.f32 %v699, %v726
  %736 = vrot.lane.b32.xlu0 %v730, 8
  %v737 = vpop.permute.xlu0 %736
  %738 = vrot.lane.b32.xlu0 %v731, 8
  %v739 = vpop.permute.xlu0 %738
  %740 = vrot.lane.b32.xlu0 %v732, 8
  %v741 = vpop.permute.xlu0 %740
  %v745 = vadd.f32 %v715, %v737
  %v746 = vadd.f32 %v716, %v739
  %v747 = vadd.f32 %v717, %v741
  %v748 = vtanh.pop %v745
  %v749 = vtanh.pop %v746
  %v750 = vtanh.pop %v747
  %754 = vrot.lane.b32.xlu0 %v748, 16
  %v755 = vpop.permute.xlu0 %754
  %756 = vrot.lane.b32.xlu0 %v749, 16
  %v757 = vpop.permute.xlu0 %756
  %758 = vrot.lane.b32.xlu0 %v750, 16
  %v759 = vpop.permute.xlu0 %758
  %v763 = vmul.f32 %v695, %v755
  %v764 = vmul.f32 %v697, %v757
  %v765 = vmul.f32 %v699, %v759
  %v766 = vsel %vm679, 1, 0
  %v767 = vsel %vm680, 1, 0
  %v768 = vsel %vm681, 1, 0
  %769 = vset.pattern.permute.xlu0 0
  %770 = vperm.xlu0 %769, %v766
  %v771 = vpop.permute.xlu0 %770
  %772 = vset.pattern.permute.xlu0 0
  %773 = vperm.xlu0 %772, %v767
  %v774 = vpop.permute.xlu0 %773
  %775 = vset.pattern.permute.xlu0 0
  %776 = vperm.xlu0 %775, %v768
  %v777 = vpop.permute.xlu0 %776
  %vm778 = vcmp.eq.s32.totalorder %v771, 1
  %vm779 = vcmp.eq.s32.totalorder %v774, 1
  %vm780 = vcmp.eq.s32.totalorder %v777, 1
  %781 = vrot.lane.b32.xlu0 %v581, 24
  %v782 = vpop.permute.xlu0 %781
  %783 = vrot.lane.b32.xlu0 %v582, 24
  %v784 = vpop.permute.xlu0 %783
  %785 = vrot.lane.b32.xlu0 %v583, 24
  %v786 = vpop.permute.xlu0 %785
  %v790 = vsel %vm778, %v763, %v782
  %v791 = vsel %vm779, %v764, %v784
  %v792 = vsel %vm780, %v765, %v786
  %v793 = vsel %vm778, %v745, %v707
  %v794 = vsel %vm779, %v746, %v709
  %v795 = vsel %vm780, %v747, %v711
  %v796 = vsel %vm778, %v763, 0.0
  %v797 = vsel %vm779, %v764, 0.0
  %v798 = vsel %vm780, %v765, 0.0
  %802 = vrot.lane.b32.xlu0 %v790, 104
  %v803 = vpop.permute.xlu0 %802
  %804 = vrot.lane.b32.xlu0 %v791, 104
  %v805 = vpop.permute.xlu0 %804
  %806 = vrot.lane.b32.xlu0 %v792, 104
  %v807 = vpop.permute.xlu0 %806
  %811 = vst.msk [vmem:[#allocation2] sm:$0xff] %vm24, %v803
  %812 = vst.msk [vmem:[#allocation2 + $0x8] sm:$0xff] %vm24, %v805
  %813 = vst.msk [vmem:[#allocation2 + $0x10] sm:$0x3f] %vm27, %v807
  %817 = vrot.lane.b32.xlu0 %v793, 120
  %v818 = vpop.permute.xlu0 %817
  %819 = vrot.lane.b32.xlu0 %v794, 120
  %v820 = vpop.permute.xlu0 %819
  %821 = vrot.lane.b32.xlu0 %v795, 120
  %v822 = vpop.permute.xlu0 %821
  %826 = vst.msk [vmem:[#allocation3] sm:$0xff] %vm24, %v818
  %827 = vst.msk [vmem:[#allocation3 + $0x8] sm:$0xff] %vm24, %v820
  %828 = vst.msk [vmem:[#allocation3 + $0x10] sm:$0x3f] %vm27, %v822
  %832 = vrot.lane.b32.xlu0 %v796, 104
  %v833 = vpop.permute.xlu0 %832
  %834 = vrot.lane.b32.xlu0 %v797, 104
  %v835 = vpop.permute.xlu0 %834
  %836 = vrot.lane.b32.xlu0 %v798, 104
  %v837 = vpop.permute.xlu0 %836
  %s841 = scalar_lea.vmem %s5, 24
  %842 = vst.msk [vmem:[%s841] sm:$0xff] %vm24, %v833
  %843 = vst.msk [vmem:[%s841 + $0x8] sm:$0xff] %vm24, %v835
  %844 = vst.msk [vmem:[%s841 + $0x10] sm:$0x3f] %vm27, %v837
  %s845 = scalar_lea.vmem %s1, 48
  %v846 = vld [vmem:[%s845] sm:$0xff]
  %v847 = vld [vmem:[%s845 + $0x8] sm:$0xff]
  %v848 = vld [vmem:[%s845 + $0x10] sm:$0x3f]
  %v849 = vld [vmem:[#allocation4] sm:$0xff]
  %v850 = vld [vmem:[#allocation4 + $0x8] sm:$0xff]
  %v851 = vld [vmem:[#allocation4 + $0x10] sm:$0x3f]
  %v853 = vsel %vm24, %v849, 0
  %v856 = vsel %vm24, %v850, 0
  %v859 = vsel %vm24, %v851, 0
  %861 = vmatprep.subr.mxu0 0.0
  %862 = vmatpush1.msra.mxu0 %v39
  %863 = vmatprep.subr.mxu0 0.0
  %864 = vmatpush1.msra.mxu0 0.0
  %865 = vmatprep.subr.mxu0 0.0
  %866 = vmatpush1.msra.mxu0 0.0
  %867 = vmatprep.subr.mxu0 0.0
  %868 = vmatpush1.msra.mxu0 0.0
  %869 = vmatprep.subr.mxu0 0.0
  %870 = vmatpush1.msra.mxu0 0.0
  %871 = vmatprep.subr.mxu0 0.0
  %872 = vmatpush1.msra.mxu0 0.0
  %873 = vmatprep.subr.mxu0 0.0
  %874 = vmatpush1.msra.mxu0 0.0
  %875 = vmatprep.subr.mxu0 0.0
  %876 = vmatpush1.msra.mxu0 0.0
  %877 = vmatprep.subr.mxu0 0.0
  %878 = vmatpush1.msra.mxu0 0.0
  %879 = vmatprep.subr.mxu0 0.0
  %880 = vmatpush1.msra.mxu0 0.0
  %881 = vmatprep.subr.mxu0 0.0
  %882 = vmatpush1.msra.mxu0 0.0
  %883 = vmatprep.subr.mxu0 0.0
  %884 = vmatpush1.msra.mxu0 0.0
  %885 = vmatprep.subr.mxu0 0.0
  %886 = vmatpush1.msra.mxu0 0.0
  %887 = vmatprep.subr.mxu0 0.0
  %888 = vmatpush1.msra.mxu0 0.0
  %889 = vmatprep.subr.mxu0 0.0
  %890 = vmatpush1.msra.mxu0 0.0
  %891 = vmatprep.subr.mxu0 0.0
  %892 = vmatpush1.msra.mxu0 0.0
  %893 = vmatprep.subr.mxu0 0.0
  %894 = vmatpush1.msra.mxu0 0.0
  %895 = vmatprep.subr.mxu0 0.0
  %896 = vmatpush1.msra.mxu0 0.0
  %897 = vmatprep.subr.mxu0 0.0
  %898 = vmatpush1.msra.mxu0 0.0
  %899 = vmatprep.subr.mxu0 0.0
  %900 = vmatpush1.msra.mxu0 0.0
  %901 = vmatprep.subr.mxu0 0.0
  %902 = vmatpush1.msra.mxu0 0.0
  %903 = vmatprep.subr.mxu0 0.0
  %904 = vmatpush1.msra.mxu0 0.0
  %905 = vmatprep.subr.mxu0 0.0
  %906 = vmatpush1.msra.mxu0 0.0
  %907 = vmatprep.subr.mxu0 0.0
  %908 = vmatpush1.msra.mxu0 0.0
  %909 = vmatprep.subr.mxu0 0.0
  %910 = vmatpush1.msra.mxu0 0.0
  %911 = vmatprep.subr.mxu0 0.0
  %912 = vmatpush1.msra.mxu0 0.0
  %913 = vmatprep.subr.mxu0 0.0
  %914 = vmatpush1.msra.mxu0 0.0
  %915 = vmatprep.subr.mxu0 0.0
  %916 = vmatpush1.msra.mxu0 0.0
  %917 = vmatprep.subr.mxu0 0.0
  %918 = vmatpush1.msra.mxu0 0.0
  %919 = vmatprep.subr.mxu0 0.0
  %920 = vmatpush1.msra.mxu0 0.0
  %921 = vmatprep.subr.mxu0 0.0
  %922 = vmatpush1.msra.mxu0 0.0
  %923 = vmatprep.subr.mxu0 0.0
  %924 = vmatpush1.msra.mxu0 0.0
  %925 = vmatprep.mubr.f32.mxu0 0.0
  %926 = vmatmul.mubr.f32.gmra.mrb[0].mxu0 %v853
  %v927 = vpop.f32.mrb[0].mxu0
  %v928 = vadd.f32 0.0, %v927
  %v929 = vpop.f32.mrb[0].mxu0
  %930 = vmatprep.mubr.f32.mxu0 0.0
  %931 = vmatmul.mubr.f32.gmra.mrb[0].mxu0 %v856
  %v932 = vpop.f32.mrb[0].mxu0
  %v933 = vadd.f32 0.0, %v932
  %v934 = vpop.f32.mrb[0].mxu0
  %935 = vmatprep.mubr.f32.mxu0 0.0
  %936 = vmatmul.mubr.f32.gmra.mrb[0].mxu0 %v859
  %v937 = vpop.f32.mrb[0].mxu0
  %v938 = vadd.f32 0.0, %v937
  %v939 = vpop.f32.mrb[0].mxu0
  %940 = vdwg.mxu0
  %v941 = vadd.f32 %v846, %v928
  %v942 = vadd.f32 %v847, %v933
  %v943 = vadd.f32 %v848, %v938
  %v944 = vld [vmem:[#allocation5] sm:$0xff]
  %v945 = vld [vmem:[#allocation5 + $0x8] sm:$0xff]
  %v946 = vld [vmem:[#allocation5 + $0x10] sm:$0x3f]
  %vm947 = vcmp.gt.s32.totalorder %v40, 2
  %vm948 = vcmp.gt.s32.totalorder %v41, 2
  %vm949 = vcmp.gt.s32.totalorder %v42, 2
  %v950 = vxor.u32 %v941, 2147483648
  %v951 = vxor.u32 %v942, 2147483648
  %v952 = vxor.u32 %v943, 2147483648
  %v953 = vmul.f32 %v950, 1.442695
  %v954 = vpow.pop %v953
  %v955 = vmul.f32 %v951, 1.442695
  %v956 = vpow.pop %v955
  %v957 = vmul.f32 %v952, 1.442695
  %v958 = vpow.pop %v957
  %v959 = vadd.f32 %v954, 1.0
  %v960 = vadd.f32 %v956, 1.0
  %v961 = vadd.f32 %v958, 1.0
  %v962 = vrcp.pop %v959
  %v963 = vmul.f32 1.0, %v962
  %v964 = vrcp.pop %v960
  %v965 = vmul.f32 1.0, %v964
  %v966 = vrcp.pop %v961
  %v967 = vmul.f32 1.0, %v966
  %v968 = vtanh.pop %v941
  %v969 = vtanh.pop %v942
  %v970 = vtanh.pop %v943
  %974 = vrot.lane.b32.xlu0 %v944, 8
  %v975 = vpop.permute.xlu0 %974
  %976 = vrot.lane.b32.xlu0 %v945, 8
  %v977 = vpop.permute.xlu0 %976
  %978 = vrot.lane.b32.xlu0 %v946, 8
  %v979 = vpop.permute.xlu0 %978
  %v983 = vmul.f32 %v963, %v975
  %v984 = vmul.f32 %v965, %v977
  %v985 = vmul.f32 %v967, %v979
  %989 = vrot.lane.b32.xlu0 %v968, 112
  %v990 = vpop.permute.xlu0 %989
  %991 = vrot.lane.b32.xlu0 %v969, 112
  %v992 = vpop.permute.xlu0 %991
  %993 = vrot.lane.b32.xlu0 %v970, 112
  %v994 = vpop.permute.xlu0 %993
  %v998 = vmul.f32 %v963, %v990
  %v999 = vmul.f32 %v965, %v992
  %v1000 = vmul.f32 %v967, %v994
  %1004 = vrot.lane.b32.xlu0 %v998, 8
  %v1005 = vpop.permute.xlu0 %1004
  %1006 = vrot.lane.b32.xlu0 %v999, 8
  %v1007 = vpop.permute.xlu0 %1006
  %1008 = vrot.lane.b32.xlu0 %v1000, 8
  %v1009 = vpop.permute.xlu0 %1008
  %v1013 = vadd.f32 %v983, %v1005
  %v1014 = vadd.f32 %v984, %v1007
  %v1015 = vadd.f32 %v985, %v1009
  %v1016 = vtanh.pop %v1013
  %v1017 = vtanh.pop %v1014
  %v1018 = vtanh.pop %v1015
  %1022 = vrot.lane.b32.xlu0 %v1016, 16
  %v1023 = vpop.permute.xlu0 %1022
  %1024 = vrot.lane.b32.xlu0 %v1017, 16
  %v1025 = vpop.permute.xlu0 %1024
  %1026 = vrot.lane.b32.xlu0 %v1018, 16
  %v1027 = vpop.permute.xlu0 %1026
  %v1031 = vmul.f32 %v963, %v1023
  %v1032 = vmul.f32 %v965, %v1025
  %v1033 = vmul.f32 %v967, %v1027
  %v1034 = vsel %vm947, 1, 0
  %v1035 = vsel %vm948, 1, 0
  %v1036 = vsel %vm949, 1, 0
  %1037 = vset.pattern.permute.xlu0 0
  %1038 = vperm.xlu0 %1037, %v1034
  %v1039 = vpop.permute.xlu0 %1038
  %1040 = vset.pattern.permute.xlu0 0
  %1041 = vperm.xlu0 %1040, %v1035
  %v1042 = vpop.permute.xlu0 %1041
  %1043 = vset.pattern.permute.xlu0 0
  %1044 = vperm.xlu0 %1043, %v1036
  %v1045 = vpop.permute.xlu0 %1044
  %vm1046 = vcmp.eq.s32.totalorder %v1039, 1
  %vm1047 = vcmp.eq.s32.totalorder %v1042, 1
  %vm1048 = vcmp.eq.s32.totalorder %v1045, 1
  %1049 = vrot.lane.b32.xlu0 %v849, 24
  %v1050 = vpop.permute.xlu0 %1049
  %1051 = vrot.lane.b32.xlu0 %v850, 24
  %v1052 = vpop.permute.xlu0 %1051
  %1053 = vrot.lane.b32.xlu0 %v851, 24
  %v1054 = vpop.permute.xlu0 %1053
  %v1058 = vsel %vm1046, %v1031, %v1050
  %v1059 = vsel %vm1047, %v1032, %v1052
  %v1060 = vsel %vm1048, %v1033, %v1054
  %v1061 = vsel %vm1046, %v1013, %v975
  %v1062 = vsel %vm1047, %v1014, %v977
  %v1063 = vsel %vm1048, %v1015, %v979
  %v1064 = vsel %vm1046, %v1031, 0.0
  %v1065 = vsel %vm1047, %v1032, 0.0
  %v1066 = vsel %vm1048, %v1033, 0.0
  %1070 = vrot.lane.b32.xlu0 %v1058, 104
  %v1071 = vpop.permute.xlu0 %1070
  %1072 = vrot.lane.b32.xlu0 %v1059, 104
  %v1073 = vpop.permute.xlu0 %1072
  %1074 = vrot.lane.b32.xlu0 %v1060, 104
  %v1075 = vpop.permute.xlu0 %1074
  %1079 = vst.msk [vmem:[#allocation4] sm:$0xff] %vm24, %v1071
  %1080 = vst.msk [vmem:[#allocation4 + $0x8] sm:$0xff] %vm24, %v1073
  %1081 = vst.msk [vmem:[#allocation4 + $0x10] sm:$0x3f] %vm27, %v1075
  %1085 = vrot.lane.b32.xlu0 %v1061, 120
  %v1086 = vpop.permute.xlu0 %1085
  %1087 = vrot.lane.b32.xlu0 %v1062, 120
  %v1088 = vpop.permute.xlu0 %1087
  %1089 = vrot.lane.b32.xlu0 %v1063, 120
  %v1090 = vpop.permute.xlu0 %1089
  %1094 = vst.msk [vmem:[#allocation5] sm:$0xff] %vm24, %v1086
  %1095 = vst.msk [vmem:[#allocation5 + $0x8] sm:$0xff] %vm24, %v1088
  %1096 = vst.msk [vmem:[#allocation5 + $0x10] sm:$0x3f] %vm27, %v1090
  %1100 = vrot.lane.b32.xlu0 %v1064, 104
  %v1101 = vpop.permute.xlu0 %1100
  %1102 = vrot.lane.b32.xlu0 %v1065, 104
  %v1103 = vpop.permute.xlu0 %1102
  %1104 = vrot.lane.b32.xlu0 %v1066, 104
  %v1105 = vpop.permute.xlu0 %1104
  %s1109 = scalar_lea.vmem %s6, 48
  %1110 = vst.msk [vmem:[%s1109] sm:$0xff] %vm24, %v1101
  %1111 = vst.msk [vmem:[%s1109 + $0x8] sm:$0xff] %vm24, %v1103
  %1112 = vst.msk [vmem:[%s1109 + $0x10] sm:$0x3f] %vm27, %v1105
  %s1113 = scalar_lea.vmem %s0, 48
  %v1114 = vld [vmem:[%s1113] sm:$0xff]
  %v1115 = vld [vmem:[%s1113 + $0x8] sm:$0xff]
  %v1116 = vld [vmem:[%s1113 + $0x10] sm:$0x3f]
  %v1117 = vld [vmem:[#allocation2] sm:$0xff]
  %v1118 = vld [vmem:[#allocation2 + $0x8] sm:$0xff]
  %v1119 = vld [vmem:[#allocation2 + $0x10] sm:$0x3f]
  %v1121 = vsel %vm24, %v1117, 0
  %v1124 = vsel %vm24, %v1118, 0
  %v1127 = vsel %vm24, %v1119, 0
  %1129 = vmatprep.subr.mxu0 0.0
  %1130 = vmatpush1.msra.mxu0 %v38
  %1131 = vmatprep.subr.mxu0 0.0
  %1132 = vmatpush1.msra.mxu0 0.0
  %1133 = vmatprep.subr.mxu0 0.0
  %1134 = vmatpush1.msra.mxu0 0.0
  %1135 = vmatprep.subr.mxu0 0.0
  %1136 = vmatpush1.msra.mxu0 0.0
  %1137 = vmatprep.subr.mxu0 0.0
  %1138 = vmatpush1.msra.mxu0 0.0
  %1139 = vmatprep.subr.mxu0 0.0
  %1140 = vmatpush1.msra.mxu0 0.0
  %1141 = vmatprep.subr.mxu0 0.0
  %1142 = vmatpush1.msra.mxu0 0.0
  %1143 = vmatprep.subr.mxu0 0.0
  %1144 = vmatpush1.msra.mxu0 0.0
  %1145 = vmatprep.subr.mxu0 0.0
  %1146 = vmatpush1.msra.mxu0 0.0
  %1147 = vmatprep.subr.mxu0 0.0
  %1148 = vmatpush1.msra.mxu0 0.0
  %1149 = vmatprep.subr.mxu0 0.0
  %1150 = vmatpush1.msra.mxu0 0.0
  %1151 = vmatprep.subr.mxu0 0.0
  %1152 = vmatpush1.msra.mxu0 0.0
  %1153 = vmatprep.subr.mxu0 0.0
  %1154 = vmatpush1.msra.mxu0 0.0
  %1155 = vmatprep.subr.mxu0 0.0
  %1156 = vmatpush1.msra.mxu0 0.0
  %1157 = vmatprep.subr.mxu0 0.0
  %1158 = vmatpush1.msra.mxu0 0.0
  %1159 = vmatprep.subr.mxu0 0.0
  %1160 = vmatpush1.msra.mxu0 0.0
  %1161 = vmatprep.subr.mxu0 0.0
  %1162 = vmatpush1.msra.mxu0 0.0
  %1163 = vmatprep.subr.mxu0 0.0
  %1164 = vmatpush1.msra.mxu0 0.0
  %1165 = vmatprep.subr.mxu0 0.0
  %1166 = vmatpush1.msra.mxu0 0.0
  %1167 = vmatprep.subr.mxu0 0.0
  %1168 = vmatpush1.msra.mxu0 0.0
  %1169 = vmatprep.subr.mxu0 0.0
  %1170 = vmatpush1.msra.mxu0 0.0
  %1171 = vmatprep.subr.mxu0 0.0
  %1172 = vmatpush1.msra.mxu0 0.0
  %1173 = vmatprep.subr.mxu0 0.0
  %1174 = vmatpush1.msra.mxu0 0.0
  %1175 = vmatprep.subr.mxu0 0.0
  %1176 = vmatpush1.msra.mxu0 0.0
  %1177 = vmatprep.subr.mxu0 0.0
  %1178 = vmatpush1.msra.mxu0 0.0
  %1179 = vmatprep.subr.mxu0 0.0
  %1180 = vmatpush1.msra.mxu0 0.0
  %1181 = vmatprep.subr.mxu0 0.0
  %1182 = vmatpush1.msra.mxu0 0.0
  %1183 = vmatprep.subr.mxu0 0.0
  %1184 = vmatpush1.msra.mxu0 0.0
  %1185 = vmatprep.subr.mxu0 0.0
  %1186 = vmatpush1.msra.mxu0 0.0
  %1187 = vmatprep.subr.mxu0 0.0
  %1188 = vmatpush1.msra.mxu0 0.0
  %1189 = vmatprep.subr.mxu0 0.0
  %1190 = vmatpush1.msra.mxu0 0.0
  %1191 = vmatprep.subr.mxu0 0.0
  %1192 = vmatpush1.msra.mxu0 0.0
  %1193 = vmatprep.mubr.f32.mxu0 0.0
  %1194 = vmatmul.mubr.f32.gmra.mrb[0].mxu0 %v1121
  %v1195 = vpop.f32.mrb[0].mxu0
  %v1196 = vadd.f32 0.0, %v1195
  %v1197 = vpop.f32.mrb[0].mxu0
  %1198 = vmatprep.mubr.f32.mxu0 0.0
  %1199 = vmatmul.mubr.f32.gmra.mrb[0].mxu0 %v1124
  %v1200 = vpop.f32.mrb[0].mxu0
  %v1201 = vadd.f32 0.0, %v1200
  %v1202 = vpop.f32.mrb[0].mxu0
  %1203 = vmatprep.mubr.f32.mxu0 0.0
  %1204 = vmatmul.mubr.f32.gmra.mrb[0].mxu0 %v1127
  %v1205 = vpop.f32.mrb[0].mxu0
  %v1206 = vadd.f32 0.0, %v1205
  %v1207 = vpop.f32.mrb[0].mxu0
  %1208 = vdwg.mxu0
  %v1209 = vadd.f32 %v1114, %v1196
  %v1210 = vadd.f32 %v1115, %v1201
  %v1211 = vadd.f32 %v1116, %v1206
  %v1212 = vld [vmem:[#allocation3] sm:$0xff]
  %v1213 = vld [vmem:[#allocation3 + $0x8] sm:$0xff]
  %v1214 = vld [vmem:[#allocation3 + $0x10] sm:$0x3f]
  %v1215 = vxor.u32 %v1209, 2147483648
  %v1216 = vxor.u32 %v1210, 2147483648
  %v1217 = vxor.u32 %v1211, 2147483648
  %v1218 = vmul.f32 %v1215, 1.442695
  %v1219 = vpow.pop %v1218
  %v1220 = vmul.f32 %v1216, 1.442695
  %v1221 = vpow.pop %v1220
  %v1222 = vmul.f32 %v1217, 1.442695
  %v1223 = vpow.pop %v1222
  %v1224 = vadd.f32 %v1219, 1.0
  %v1225 = vadd.f32 %v1221, 1.0
  %v1226 = vadd.f32 %v1223, 1.0
  %v1227 = vrcp.pop %v1224
  %v1228 = vmul.f32 1.0, %v1227
  %v1229 = vrcp.pop %v1225
  %v1230 = vmul.f32 1.0, %v1229
  %v1231 = vrcp.pop %v1226
  %v1232 = vmul.f32 1.0, %v1231
  %v1233 = vtanh.pop %v1209
  %v1234 = vtanh.pop %v1210
  %v1235 = vtanh.pop %v1211
  %1239 = vrot.lane.b32.xlu0 %v1212, 8
  %v1240 = vpop.permute.xlu0 %1239
  %1241 = vrot.lane.b32.xlu0 %v1213, 8
  %v1242 = vpop.permute.xlu0 %1241
  %1243 = vrot.lane.b32.xlu0 %v1214, 8
  %v1244 = vpop.permute.xlu0 %1243
  %v1248 = vmul.f32 %v1228, %v1240
  %v1249 = vmul.f32 %v1230, %v1242
  %v1250 = vmul.f32 %v1232, %v1244
  %1254 = vrot.lane.b32.xlu0 %v1233, 112
  %v1255 = vpop.permute.xlu0 %1254
  %1256 = vrot.lane.b32.xlu0 %v1234, 112
  %v1257 = vpop.permute.xlu0 %1256
  %1258 = vrot.lane.b32.xlu0 %v1235, 112
  %v1259 = vpop.permute.xlu0 %1258
  %v1263 = vmul.f32 %v1228, %v1255
  %v1264 = vmul.f32 %v1230, %v1257
  %v1265 = vmul.f32 %v1232, %v1259
  %1269 = vrot.lane.b32.xlu0 %v1263, 8
  %v1270 = vpop.permute.xlu0 %1269
  %1271 = vrot.lane.b32.xlu0 %v1264, 8
  %v1272 = vpop.permute.xlu0 %1271
  %1273 = vrot.lane.b32.xlu0 %v1265, 8
  %v1274 = vpop.permute.xlu0 %1273
  %v1278 = vadd.f32 %v1248, %v1270
  %v1279 = vadd.f32 %v1249, %v1272
  %v1280 = vadd.f32 %v1250, %v1274
  %v1281 = vtanh.pop %v1278
  %v1282 = vtanh.pop %v1279
  %v1283 = vtanh.pop %v1280
  %1287 = vrot.lane.b32.xlu0 %v1281, 16
  %v1288 = vpop.permute.xlu0 %1287
  %1289 = vrot.lane.b32.xlu0 %v1282, 16
  %v1290 = vpop.permute.xlu0 %1289
  %1291 = vrot.lane.b32.xlu0 %v1283, 16
  %v1292 = vpop.permute.xlu0 %1291
  %v1296 = vmul.f32 %v1228, %v1288
  %v1297 = vmul.f32 %v1230, %v1290
  %v1298 = vmul.f32 %v1232, %v1292
  %1299 = vrot.lane.b32.xlu0 %v1117, 24
  %v1300 = vpop.permute.xlu0 %1299
  %1301 = vrot.lane.b32.xlu0 %v1118, 24
  %v1302 = vpop.permute.xlu0 %1301
  %1303 = vrot.lane.b32.xlu0 %v1119, 24
  %v1304 = vpop.permute.xlu0 %1303
  %v1308 = vsel %vm1046, %v1296, %v1300
  %v1309 = vsel %vm1047, %v1297, %v1302
  %v1310 = vsel %vm1048, %v1298, %v1304
  %v1311 = vsel %vm1046, %v1278, %v1240
  %v1312 = vsel %vm1047, %v1279, %v1242
  %v1313 = vsel %vm1048, %v1280, %v1244
  %v1314 = vsel %vm1046, %v1296, 0.0
  %v1315 = vsel %vm1047, %v1297, 0.0
  %v1316 = vsel %vm1048, %v1298, 0.0
  %1320 = vrot.lane.b32.xlu0 %v1308, 104
  %v1321 = vpop.permute.xlu0 %1320
  %1322 = vrot.lane.b32.xlu0 %v1309, 104
  %v1323 = vpop.permute.xlu0 %1322
  %1324 = vrot.lane.b32.xlu0 %v1310, 104
  %v1325 = vpop.permute.xlu0 %1324
  %1329 = vst.msk [vmem:[#allocation2] sm:$0xff] %vm24, %v1321
  %1330 = vst.msk [vmem:[#allocation2 + $0x8] sm:$0xff] %vm24, %v1323
  %1331 = vst.msk [vmem:[#allocation2 + $0x10] sm:$0x3f] %vm27, %v1325
  %1335 = vrot.lane.b32.xlu0 %v1311, 120
  %v1336 = vpop.permute.xlu0 %1335
  %1337 = vrot.lane.b32.xlu0 %v1312, 120
  %v1338 = vpop.permute.xlu0 %1337
  %1339 = vrot.lane.b32.xlu0 %v1313, 120
  %v1340 = vpop.permute.xlu0 %1339
  %1344 = vst.msk [vmem:[#allocation3] sm:$0xff] %vm24, %v1336
  %1345 = vst.msk [vmem:[#allocation3 + $0x8] sm:$0xff] %vm24, %v1338
  %1346 = vst.msk [vmem:[#allocation3 + $0x10] sm:$0x3f] %vm27, %v1340
  %1350 = vrot.lane.b32.xlu0 %v1314, 104
  %v1351 = vpop.permute.xlu0 %1350
  %1352 = vrot.lane.b32.xlu0 %v1315, 104
  %v1353 = vpop.permute.xlu0 %1352
  %1354 = vrot.lane.b32.xlu0 %v1316, 104
  %v1355 = vpop.permute.xlu0 %1354
  %s1359 = scalar_lea.vmem %s5, 48
  %1360 = vst.msk [vmem:[%s1359] sm:$0xff] %vm24, %v1351
  %1361 = vst.msk [vmem:[%s1359 + $0x8] sm:$0xff] %vm24, %v1353
  %1362 = vst.msk [vmem:[%s1359 + $0x10] sm:$0x3f] %vm27, %v1355
  %s1363 = scalar_lea.vmem %s1, 24
  %v1364 = vld [vmem:[%s1363] sm:$0xff]
  %v1365 = vld [vmem:[%s1363 + $0x8] sm:$0xff]
  %v1366 = vld [vmem:[%s1363 + $0x10] sm:$0x3f]
  %v1367 = vld [vmem:[#allocation4] sm:$0xff]
  %v1368 = vld [vmem:[#allocation4 + $0x8] sm:$0xff]
  %v1369 = vld [vmem:[#allocation4 + $0x10] sm:$0x3f]
  %v1371 = vsel %vm24, %v1367, 0
  %v1374 = vsel %vm24, %v1368, 0
  %v1377 = vsel %vm24, %v1369, 0
  %1379 = vmatprep.subr.mxu0 0.0
  %1380 = vmatpush1.msra.mxu0 %v39
  %1381 = vmatprep.subr.mxu0 0.0
  %1382 = vmatpush1.msra.mxu0 0.0
  %1383 = vmatprep.subr.mxu0 0.0
  %1384 = vmatpush1.msra.mxu0 0.0
  %1385 = vmatprep.subr.mxu0 0.0
  %1386 = vmatpush1.msra.mxu0 0.0
  %1387 = vmatprep.subr.mxu0 0.0
  %1388 = vmatpush1.msra.mxu0 0.0
  %1389 = vmatprep.subr.mxu0 0.0
  %1390 = vmatpush1.msra.mxu0 0.0
  %1391 = vmatprep.subr.mxu0 0.0
  %1392 = vmatpush1.msra.mxu0 0.0
  %1393 = vmatprep.subr.mxu0 0.0
  %1394 = vmatpush1.msra.mxu0 0.0
  %1395 = vmatprep.subr.mxu0 0.0
  %1396 = vmatpush1.msra.mxu0 0.0
  %1397 = vmatprep.subr.mxu0 0.0
  %1398 = vmatpush1.msra.mxu0 0.0
  %1399 = vmatprep.subr.mxu0 0.0
  %1400 = vmatpush1.msra.mxu0 0.0
  %1401 = vmatprep.subr.mxu0 0.0
  %1402 = vmatpush1.msra.mxu0 0.0
  %1403 = vmatprep.subr.mxu0 0.0
  %1404 = vmatpush1.msra.mxu0 0.0
  %1405 = vmatprep.subr.mxu0 0.0
  %1406 = vmatpush1.msra.mxu0 0.0
  %1407 = vmatprep.subr.mxu0 0.0
  %1408 = vmatpush1.msra.mxu0 0.0
  %1409 = vmatprep.subr.mxu0 0.0
  %1410 = vmatpush1.msra.mxu0 0.0
  %1411 = vmatprep.subr.mxu0 0.0
  %1412 = vmatpush1.msra.mxu0 0.0
  %1413 = vmatprep.subr.mxu0 0.0
  %1414 = vmatpush1.msra.mxu0 0.0
  %1415 = vmatprep.subr.mxu0 0.0
  %1416 = vmatpush1.msra.mxu0 0.0
  %1417 = vmatprep.subr.mxu0 0.0
  %1418 = vmatpush1.msra.mxu0 0.0
  %1419 = vmatprep.subr.mxu0 0.0
  %1420 = vmatpush1.msra.mxu0 0.0
  %1421 = vmatprep.subr.mxu0 0.0
  %1422 = vmatpush1.msra.mxu0 0.0
  %1423 = vmatprep.subr.mxu0 0.0
  %1424 = vmatpush1.msra.mxu0 0.0
  %1425 = vmatprep.subr.mxu0 0.0
  %1426 = vmatpush1.msra.mxu0 0.0
  %1427 = vmatprep.subr.mxu0 0.0
  %1428 = vmatpush1.msra.mxu0 0.0
  %1429 = vmatprep.subr.mxu0 0.0
  %1430 = vmatpush1.msra.mxu0 0.0
  %1431 = vmatprep.subr.mxu0 0.0
  %1432 = vmatpush1.msra.mxu0 0.0
  %1433 = vmatprep.subr.mxu0 0.0
  %1434 = vmatpush1.msra.mxu0 0.0
  %1435 = vmatprep.subr.mxu0 0.0
  %1436 = vmatpush1.msra.mxu0 0.0
  %1437 = vmatprep.subr.mxu0 0.0
  %1438 = vmatpush1.msra.mxu0 0.0
  %1439 = vmatprep.subr.mxu0 0.0
  %1440 = vmatpush1.msra.mxu0 0.0
  %1441 = vmatprep.subr.mxu0 0.0
  %1442 = vmatpush1.msra.mxu0 0.0
  %1443 = vmatprep.mubr.f32.mxu0 0.0
  %1444 = vmatmul.mubr.f32.gmra.mrb[0].mxu0 %v1371
  %v1445 = vpop.f32.mrb[0].mxu0
  %v1446 = vadd.f32 0.0, %v1445
  %v1447 = vpop.f32.mrb[0].mxu0
  %1448 = vmatprep.mubr.f32.mxu0 0.0
  %1449 = vmatmul.mubr.f32.gmra.mrb[0].mxu0 %v1374
  %v1450 = vpop.f32.mrb[0].mxu0
  %v1451 = vadd.f32 0.0, %v1450
  %v1452 = vpop.f32.mrb[0].mxu0
  %1453 = vmatprep.mubr.f32.mxu0 0.0
  %1454 = vmatmul.mubr.f32.gmra.mrb[0].mxu0 %v1377
  %v1455 = vpop.f32.mrb[0].mxu0
  %v1456 = vadd.f32 0.0, %v1455
  %v1457 = vpop.f32.mrb[0].mxu0
  %1458 = vdwg.mxu0
  %v1459 = vadd.f32 %v1364, %v1446
  %v1460 = vadd.f32 %v1365, %v1451
  %v1461 = vadd.f32 %v1366, %v1456
  %v1462 = vld [vmem:[#allocation5] sm:$0xff]
  %v1463 = vld [vmem:[#allocation5 + $0x8] sm:$0xff]
  %v1464 = vld [vmem:[#allocation5 + $0x10] sm:$0x3f]
  %v1465 = vxor.u32 %v1459, 2147483648
  %v1466 = vxor.u32 %v1460, 2147483648
  %v1467 = vxor.u32 %v1461, 2147483648
  %v1468 = vmul.f32 %v1465, 1.442695
  %v1469 = vpow.pop %v1468
  %v1470 = vmul.f32 %v1466, 1.442695
  %v1471 = vpow.pop %v1470
  %v1472 = vmul.f32 %v1467, 1.442695
  %v1473 = vpow.pop %v1472
  %v1474 = vadd.f32 %v1469, 1.0
  %v1475 = vadd.f32 %v1471, 1.0
  %v1476 = vadd.f32 %v1473, 1.0
  %v1477 = vrcp.pop %v1474
  %v1478 = vmul.f32 1.0, %v1477
  %v1479 = vrcp.pop %v1475
  %v1480 = vmul.f32 1.0, %v1479
  %v1481 = vrcp.pop %v1476
  %v1482 = vmul.f32 1.0, %v1481
  %v1483 = vtanh.pop %v1459
  %v1484 = vtanh.pop %v1460
  %v1485 = vtanh.pop %v1461
  %1489 = vrot.lane.b32.xlu0 %v1462, 8
  %v1490 = vpop.permute.xlu0 %1489
  %1491 = vrot.lane.b32.xlu0 %v1463, 8
  %v1492 = vpop.permute.xlu0 %1491
  %1493 = vrot.lane.b32.xlu0 %v1464, 8
  %v1494 = vpop.permute.xlu0 %1493
  %v1498 = vmul.f32 %v1478, %v1490
  %v1499 = vmul.f32 %v1480, %v1492
  %v1500 = vmul.f32 %v1482, %v1494
  %1504 = vrot.lane.b32.xlu0 %v1483, 112
  %v1505 = vpop.permute.xlu0 %1504
  %1506 = vrot.lane.b32.xlu0 %v1484, 112
  %v1507 = vpop.permute.xlu0 %1506
  %1508 = vrot.lane.b32.xlu0 %v1485, 112
  %v1509 = vpop.permute.xlu0 %1508
  %v1513 = vmul.f32 %v1478, %v1505
  %v1514 = vmul.f32 %v1480, %v1507
  %v1515 = vmul.f32 %v1482, %v1509
  %1519 = vrot.lane.b32.xlu0 %v1513, 8
  %v1520 = vpop.permute.xlu0 %1519
  %1521 = vrot.lane.b32.xlu0 %v1514, 8
  %v1522 = vpop.permute.xlu0 %1521
  %1523 = vrot.lane.b32.xlu0 %v1515, 8
  %v1524 = vpop.permute.xlu0 %1523
  %v1528 = vadd.f32 %v1498, %v1520
  %v1529 = vadd.f32 %v1499, %v1522
  %v1530 = vadd.f32 %v1500, %v1524
  %v1531 = vtanh.pop %v1528
  %v1532 = vtanh.pop %v1529
  %v1533 = vtanh.pop %v1530
  %1537 = vrot.lane.b32.xlu0 %v1531, 16
  %v1538 = vpop.permute.xlu0 %1537
  %1539 = vrot.lane.b32.xlu0 %v1532, 16
  %v1540 = vpop.permute.xlu0 %1539
  %1541 = vrot.lane.b32.xlu0 %v1533, 16
  %v1542 = vpop.permute.xlu0 %1541
  %v1546 = vmul.f32 %v1478, %v1538
  %v1547 = vmul.f32 %v1480, %v1540
  %v1548 = vmul.f32 %v1482, %v1542
  %1549 = vrot.lane.b32.xlu0 %v1367, 24
  %v1550 = vpop.permute.xlu0 %1549
  %1551 = vrot.lane.b32.xlu0 %v1368, 24
  %v1552 = vpop.permute.xlu0 %1551
  %1553 = vrot.lane.b32.xlu0 %v1369, 24
  %v1554 = vpop.permute.xlu0 %1553
  %v1558 = vsel %vm778, %v1546, %v1550
  %v1559 = vsel %vm779, %v1547, %v1552
  %v1560 = vsel %vm780, %v1548, %v1554
  %v1561 = vsel %vm778, %v1528, %v1490
  %v1562 = vsel %vm779, %v1529, %v1492
  %v1563 = vsel %vm780, %v1530, %v1494
  %v1564 = vsel %vm778, %v1546, 0.0
  %v1565 = vsel %vm779, %v1547, 0.0
  %v1566 = vsel %vm780, %v1548, 0.0
  %1570 = vrot.lane.b32.xlu0 %v1558, 104
  %v1571 = vpop.permute.xlu0 %1570
  %1572 = vrot.lane.b32.xlu0 %v1559, 104
  %v1573 = vpop.permute.xlu0 %1572
  %1574 = vrot.lane.b32.xlu0 %v1560, 104
  %v1575 = vpop.permute.xlu0 %1574
  %1579 = vst.msk [vmem:[#allocation4] sm:$0xff] %vm24, %v1571
  %1580 = vst.msk [vmem:[#allocation4 + $0x8] sm:$0xff] %vm24, %v1573
  %1581 = vst.msk [vmem:[#allocation4 + $0x10] sm:$0x3f] %vm27, %v1575
  %1585 = vrot.lane.b32.xlu0 %v1561, 120
  %v1586 = vpop.permute.xlu0 %1585
  %1587 = vrot.lane.b32.xlu0 %v1562, 120
  %v1588 = vpop.permute.xlu0 %1587
  %1589 = vrot.lane.b32.xlu0 %v1563, 120
  %v1590 = vpop.permute.xlu0 %1589
  %1594 = vst.msk [vmem:[#allocation5] sm:$0xff] %vm24, %v1586
  %1595 = vst.msk [vmem:[#allocation5 + $0x8] sm:$0xff] %vm24, %v1588
  %1596 = vst.msk [vmem:[#allocation5 + $0x10] sm:$0x3f] %vm27, %v1590
  %1600 = vrot.lane.b32.xlu0 %v1564, 104
  %v1601 = vpop.permute.xlu0 %1600
  %1602 = vrot.lane.b32.xlu0 %v1565, 104
  %v1603 = vpop.permute.xlu0 %1602
  %1604 = vrot.lane.b32.xlu0 %v1566, 104
  %v1605 = vpop.permute.xlu0 %1604
  %s1609 = scalar_lea.vmem %s6, 24
  %1610 = vst.msk [vmem:[%s1609] sm:$0xff] %vm24, %v1601
  %1611 = vst.msk [vmem:[%s1609 + $0x8] sm:$0xff] %vm24, %v1603
  %1612 = vst.msk [vmem:[%s1609 + $0x10] sm:$0x3f] %vm27, %v1605
  %s1613 = scalar_lea.vmem %s0, 72
  %v1614 = vld [vmem:[%s1613] sm:$0xff]
  %v1615 = vld [vmem:[%s1613 + $0x8] sm:$0xff]
  %v1616 = vld [vmem:[%s1613 + $0x10] sm:$0x3f]
  %v1617 = vld [vmem:[#allocation2] sm:$0xff]
  %v1618 = vld [vmem:[#allocation2 + $0x8] sm:$0xff]
  %v1619 = vld [vmem:[#allocation2 + $0x10] sm:$0x3f]
  %v1621 = vsel %vm24, %v1617, 0
  %v1624 = vsel %vm24, %v1618, 0
  %v1627 = vsel %vm24, %v1619, 0
  %1629 = vmatprep.subr.mxu0 0.0
  %1630 = vmatpush1.msra.mxu0 %v38
  %1631 = vmatprep.subr.mxu0 0.0
  %1632 = vmatpush1.msra.mxu0 0.0
  %1633 = vmatprep.subr.mxu0 0.0
  %1634 = vmatpush1.msra.mxu0 0.0
  %1635 = vmatprep.subr.mxu0 0.0
  %1636 = vmatpush1.msra.mxu0 0.0
  %1637 = vmatprep.subr.mxu0 0.0
  %1638 = vmatpush1.msra.mxu0 0.0
  %1639 = vmatprep.subr.mxu0 0.0
  %1640 = vmatpush1.msra.mxu0 0.0
  %1641 = vmatprep.subr.mxu0 0.0
  %1642 = vmatpush1.msra.mxu0 0.0
  %1643 = vmatprep.subr.mxu0 0.0
  %1644 = vmatpush1.msra.mxu0 0.0
  %1645 = vmatprep.subr.mxu0 0.0
  %1646 = vmatpush1.msra.mxu0 0.0
  %1647 = vmatprep.subr.mxu0 0.0
  %1648 = vmatpush1.msra.mxu0 0.0
  %1649 = vmatprep.subr.mxu0 0.0
  %1650 = vmatpush1.msra.mxu0 0.0
  %1651 = vmatprep.subr.mxu0 0.0
  %1652 = vmatpush1.msra.mxu0 0.0
  %1653 = vmatprep.subr.mxu0 0.0
  %1654 = vmatpush1.msra.mxu0 0.0
  %1655 = vmatprep.subr.mxu0 0.0
  %1656 = vmatpush1.msra.mxu0 0.0
  %1657 = vmatprep.subr.mxu0 0.0
  %1658 = vmatpush1.msra.mxu0 0.0
  %1659 = vmatprep.subr.mxu0 0.0
  %1660 = vmatpush1.msra.mxu0 0.0
  %1661 = vmatprep.subr.mxu0 0.0
  %1662 = vmatpush1.msra.mxu0 0.0
  %1663 = vmatprep.subr.mxu0 0.0
  %1664 = vmatpush1.msra.mxu0 0.0
  %1665 = vmatprep.subr.mxu0 0.0
  %1666 = vmatpush1.msra.mxu0 0.0
  %1667 = vmatprep.subr.mxu0 0.0
  %1668 = vmatpush1.msra.mxu0 0.0
  %1669 = vmatprep.subr.mxu0 0.0
  %1670 = vmatpush1.msra.mxu0 0.0
  %1671 = vmatprep.subr.mxu0 0.0
  %1672 = vmatpush1.msra.mxu0 0.0
  %1673 = vmatprep.subr.mxu0 0.0
  %1674 = vmatpush1.msra.mxu0 0.0
  %1675 = vmatprep.subr.mxu0 0.0
  %1676 = vmatpush1.msra.mxu0 0.0
  %1677 = vmatprep.subr.mxu0 0.0
  %1678 = vmatpush1.msra.mxu0 0.0
  %1679 = vmatprep.subr.mxu0 0.0
  %1680 = vmatpush1.msra.mxu0 0.0
  %1681 = vmatprep.subr.mxu0 0.0
  %1682 = vmatpush1.msra.mxu0 0.0
  %1683 = vmatprep.subr.mxu0 0.0
  %1684 = vmatpush1.msra.mxu0 0.0
  %1685 = vmatprep.subr.mxu0 0.0
  %1686 = vmatpush1.msra.mxu0 0.0
  %1687 = vmatprep.subr.mxu0 0.0
  %1688 = vmatpush1.msra.mxu0 0.0
  %1689 = vmatprep.subr.mxu0 0.0
  %1690 = vmatpush1.msra.mxu0 0.0
  %1691 = vmatprep.subr.mxu0 0.0
  %1692 = vmatpush1.msra.mxu0 0.0
  %1693 = vmatprep.mubr.f32.mxu0 0.0
  %1694 = vmatmul.mubr.f32.gmra.mrb[0].mxu0 %v1621
  %v1695 = vpop.f32.mrb[0].mxu0
  %v1696 = vadd.f32 0.0, %v1695
  %v1697 = vpop.f32.mrb[0].mxu0
  %1698 = vmatprep.mubr.f32.mxu0 0.0
  %1699 = vmatmul.mubr.f32.gmra.mrb[0].mxu0 %v1624
  %v1700 = vpop.f32.mrb[0].mxu0
  %v1701 = vadd.f32 0.0, %v1700
  %v1702 = vpop.f32.mrb[0].mxu0
  %1703 = vmatprep.mubr.f32.mxu0 0.0
  %1704 = vmatmul.mubr.f32.gmra.mrb[0].mxu0 %v1627
  %v1705 = vpop.f32.mrb[0].mxu0
  %v1706 = vadd.f32 0.0, %v1705
  %v1707 = vpop.f32.mrb[0].mxu0
  %1708 = vdwg.mxu0
  %v1709 = vadd.f32 %v1614, %v1696
  %v1710 = vadd.f32 %v1615, %v1701
  %v1711 = vadd.f32 %v1616, %v1706
  %v1712 = vld [vmem:[#allocation3] sm:$0xff]
  %v1713 = vld [vmem:[#allocation3 + $0x8] sm:$0xff]
  %v1714 = vld [vmem:[#allocation3 + $0x10] sm:$0x3f]
  %v1715 = vxor.u32 %v1709, 2147483648
  %v1716 = vxor.u32 %v1710, 2147483648
  %v1717 = vxor.u32 %v1711, 2147483648
  %v1718 = vmul.f32 %v1715, 1.442695
  %v1719 = vpow.pop %v1718
  %v1720 = vmul.f32 %v1716, 1.442695
  %v1721 = vpow.pop %v1720
  %v1722 = vmul.f32 %v1717, 1.442695
  %v1723 = vpow.pop %v1722
  %v1724 = vadd.f32 %v1719, 1.0
  %v1725 = vadd.f32 %v1721, 1.0
  %v1726 = vadd.f32 %v1723, 1.0
  %v1727 = vrcp.pop %v1724
  %v1728 = vmul.f32 1.0, %v1727
  %v1729 = vrcp.pop %v1725
  %v1730 = vmul.f32 1.0, %v1729
  %v1731 = vrcp.pop %v1726
  %v1732 = vmul.f32 1.0, %v1731
  %v1733 = vtanh.pop %v1709
  %v1734 = vtanh.pop %v1710
  %v1735 = vtanh.pop %v1711
  %1739 = vrot.lane.b32.xlu0 %v1712, 8
  %v1740 = vpop.permute.xlu0 %1739
  %1741 = vrot.lane.b32.xlu0 %v1713, 8
  %v1742 = vpop.permute.xlu0 %1741
  %1743 = vrot.lane.b32.xlu0 %v1714, 8
  %v1744 = vpop.permute.xlu0 %1743
  %v1748 = vmul.f32 %v1728, %v1740
  %v1749 = vmul.f32 %v1730, %v1742
  %v1750 = vmul.f32 %v1732, %v1744
  %1754 = vrot.lane.b32.xlu0 %v1733, 112
  %v1755 = vpop.permute.xlu0 %1754
  %1756 = vrot.lane.b32.xlu0 %v1734, 112
  %v1757 = vpop.permute.xlu0 %1756
  %1758 = vrot.lane.b32.xlu0 %v1735, 112
  %v1759 = vpop.permute.xlu0 %1758
  %v1763 = vmul.f32 %v1728, %v1755
  %v1764 = vmul.f32 %v1730, %v1757
  %v1765 = vmul.f32 %v1732, %v1759
  %1769 = vrot.lane.b32.xlu0 %v1763, 8
  %v1770 = vpop.permute.xlu0 %1769
  %1771 = vrot.lane.b32.xlu0 %v1764, 8
  %v1772 = vpop.permute.xlu0 %1771
  %1773 = vrot.lane.b32.xlu0 %v1765, 8
  %v1774 = vpop.permute.xlu0 %1773
  %v1778 = vadd.f32 %v1748, %v1770
  %v1779 = vadd.f32 %v1749, %v1772
  %v1780 = vadd.f32 %v1750, %v1774
  %v1781 = vtanh.pop %v1778
  %v1782 = vtanh.pop %v1779
  %v1783 = vtanh.pop %v1780
  %1787 = vrot.lane.b32.xlu0 %v1781, 16
  %v1788 = vpop.permute.xlu0 %1787
  %1789 = vrot.lane.b32.xlu0 %v1782, 16
  %v1790 = vpop.permute.xlu0 %1789
  %1791 = vrot.lane.b32.xlu0 %v1783, 16
  %v1792 = vpop.permute.xlu0 %1791
  %v1796 = vmul.f32 %v1728, %v1788
  %v1797 = vmul.f32 %v1730, %v1790
  %v1798 = vmul.f32 %v1732, %v1792
  %1799 = vrot.lane.b32.xlu0 %v1617, 24
  %v1800 = vpop.permute.xlu0 %1799
  %1801 = vrot.lane.b32.xlu0 %v1618, 24
  %v1802 = vpop.permute.xlu0 %1801
  %1803 = vrot.lane.b32.xlu0 %v1619, 24
  %v1804 = vpop.permute.xlu0 %1803
  %v1808 = vsel %vm510, %v1796, %v1800
  %v1809 = vsel %vm511, %v1797, %v1802
  %v1810 = vsel %vm512, %v1798, %v1804
  %v1811 = vsel %vm510, %v1778, %v1740
  %v1812 = vsel %vm511, %v1779, %v1742
  %v1813 = vsel %vm512, %v1780, %v1744
  %v1814 = vsel %vm510, %v1796, 0.0
  %v1815 = vsel %vm511, %v1797, 0.0
  %v1816 = vsel %vm512, %v1798, 0.0
  %1820 = vrot.lane.b32.xlu0 %v1808, 104
  %v1821 = vpop.permute.xlu0 %1820
  %1822 = vrot.lane.b32.xlu0 %v1809, 104
  %v1823 = vpop.permute.xlu0 %1822
  %1824 = vrot.lane.b32.xlu0 %v1810, 104
  %v1825 = vpop.permute.xlu0 %1824
  %1829 = vst.msk [vmem:[#allocation2] sm:$0xff] %vm24, %v1821
  %1830 = vst.msk [vmem:[#allocation2 + $0x8] sm:$0xff] %vm24, %v1823
  %1831 = vst.msk [vmem:[#allocation2 + $0x10] sm:$0x3f] %vm27, %v1825
  %1835 = vrot.lane.b32.xlu0 %v1811, 120
  %v1836 = vpop.permute.xlu0 %1835
  %1837 = vrot.lane.b32.xlu0 %v1812, 120
  %v1838 = vpop.permute.xlu0 %1837
  %1839 = vrot.lane.b32.xlu0 %v1813, 120
  %v1840 = vpop.permute.xlu0 %1839
  %1844 = vst.msk [vmem:[#allocation3] sm:$0xff] %vm24, %v1836
  %1845 = vst.msk [vmem:[#allocation3 + $0x8] sm:$0xff] %vm24, %v1838
  %1846 = vst.msk [vmem:[#allocation3 + $0x10] sm:$0x3f] %vm27, %v1840
  %1850 = vrot.lane.b32.xlu0 %v1814, 104
  %v1851 = vpop.permute.xlu0 %1850
  %1852 = vrot.lane.b32.xlu0 %v1815, 104
  %v1853 = vpop.permute.xlu0 %1852
  %1854 = vrot.lane.b32.xlu0 %v1816, 104
  %v1855 = vpop.permute.xlu0 %1854
  %s1859 = scalar_lea.vmem %s5, 72
  %1860 = vst.msk [vmem:[%s1859] sm:$0xff] %vm24, %v1851
  %1861 = vst.msk [vmem:[%s1859 + $0x8] sm:$0xff] %vm24, %v1853
  %1862 = vst.msk [vmem:[%s1859 + $0x10] sm:$0x3f] %vm27, %v1855
  %v1863 = vld [vmem:[%s1] sm:$0xff]
  %v1864 = vld [vmem:[%s1 + $0x8] sm:$0xff]
  %v1865 = vld [vmem:[%s1 + $0x10] sm:$0x3f]
  %v1866 = vld [vmem:[#allocation4] sm:$0xff]
  %v1867 = vld [vmem:[#allocation4 + $0x8] sm:$0xff]
  %v1868 = vld [vmem:[#allocation4 + $0x10] sm:$0x3f]
  %v1870 = vsel %vm24, %v1866, 0
  %v1873 = vsel %vm24, %v1867, 0
  %v1876 = vsel %vm24, %v1868, 0
  %1878 = vmatprep.subr.mxu0 0.0
  %1879 = vmatpush1.msra.mxu0 %v39
  %1880 = vmatprep.subr.mxu0 0.0
  %1881 = vmatpush1.msra.mxu0 0.0
  %1882 = vmatprep.subr.mxu0 0.0
  %1883 = vmatpush1.msra.mxu0 0.0
  %1884 = vmatprep.subr.mxu0 0.0
  %1885 = vmatpush1.msra.mxu0 0.0
  %1886 = vmatprep.subr.mxu0 0.0
  %1887 = vmatpush1.msra.mxu0 0.0
  %1888 = vmatprep.subr.mxu0 0.0
  %1889 = vmatpush1.msra.mxu0 0.0
  %1890 = vmatprep.subr.mxu0 0.0
  %1891 = vmatpush1.msra.mxu0 0.0
  %1892 = vmatprep.subr.mxu0 0.0
  %1893 = vmatpush1.msra.mxu0 0.0
  %1894 = vmatprep.subr.mxu0 0.0
  %1895 = vmatpush1.msra.mxu0 0.0
  %1896 = vmatprep.subr.mxu0 0.0
  %1897 = vmatpush1.msra.mxu0 0.0
  %1898 = vmatprep.subr.mxu0 0.0
  %1899 = vmatpush1.msra.mxu0 0.0
  %1900 = vmatprep.subr.mxu0 0.0
  %1901 = vmatpush1.msra.mxu0 0.0
  %1902 = vmatprep.subr.mxu0 0.0
  %1903 = vmatpush1.msra.mxu0 0.0
  %1904 = vmatprep.subr.mxu0 0.0
  %1905 = vmatpush1.msra.mxu0 0.0
  %1906 = vmatprep.subr.mxu0 0.0
  %1907 = vmatpush1.msra.mxu0 0.0
  %1908 = vmatprep.subr.mxu0 0.0
  %1909 = vmatpush1.msra.mxu0 0.0
  %1910 = vmatprep.subr.mxu0 0.0
  %1911 = vmatpush1.msra.mxu0 0.0
  %1912 = vmatprep.subr.mxu0 0.0
  %1913 = vmatpush1.msra.mxu0 0.0
  %1914 = vmatprep.subr.mxu0 0.0
  %1915 = vmatpush1.msra.mxu0 0.0
  %1916 = vmatprep.subr.mxu0 0.0
  %1917 = vmatpush1.msra.mxu0 0.0
  %1918 = vmatprep.subr.mxu0 0.0
  %1919 = vmatpush1.msra.mxu0 0.0
  %1920 = vmatprep.subr.mxu0 0.0
  %1921 = vmatpush1.msra.mxu0 0.0
  %1922 = vmatprep.subr.mxu0 0.0
  %1923 = vmatpush1.msra.mxu0 0.0
  %1924 = vmatprep.subr.mxu0 0.0
  %1925 = vmatpush1.msra.mxu0 0.0
  %1926 = vmatprep.subr.mxu0 0.0
  %1927 = vmatpush1.msra.mxu0 0.0
  %1928 = vmatprep.subr.mxu0 0.0
  %1929 = vmatpush1.msra.mxu0 0.0
  %1930 = vmatprep.subr.mxu0 0.0
  %1931 = vmatpush1.msra.mxu0 0.0
  %1932 = vmatprep.subr.mxu0 0.0
  %1933 = vmatpush1.msra.mxu0 0.0
  %1934 = vmatprep.subr.mxu0 0.0
  %1935 = vmatpush1.msra.mxu0 0.0
  %1936 = vmatprep.subr.mxu0 0.0
  %1937 = vmatpush1.msra.mxu0 0.0
  %1938 = vmatprep.subr.mxu0 0.0
  %1939 = vmatpush1.msra.mxu0 0.0
  %1940 = vmatprep.subr.mxu0 0.0
  %1941 = vmatpush1.msra.mxu0 0.0
  %1942 = vmatprep.mubr.f32.mxu0 0.0
  %1943 = vmatmul.mubr.f32.gmra.mrb[0].mxu0 %v1870
  %v1944 = vpop.f32.mrb[0].mxu0
  %v1945 = vadd.f32 0.0, %v1944
  %v1946 = vpop.f32.mrb[0].mxu0
  %1947 = vmatprep.mubr.f32.mxu0 0.0
  %1948 = vmatmul.mubr.f32.gmra.mrb[0].mxu0 %v1873
  %v1949 = vpop.f32.mrb[0].mxu0
  %v1950 = vadd.f32 0.0, %v1949
  %v1951 = vpop.f32.mrb[0].mxu0
  %1952 = vmatprep.mubr.f32.mxu0 0.0
  %1953 = vmatmul.mubr.f32.gmra.mrb[0].mxu0 %v1876
  %v1954 = vpop.f32.mrb[0].mxu0
  %v1955 = vadd.f32 0.0, %v1954
  %v1956 = vpop.f32.mrb[0].mxu0
  %1957 = vdwg.mxu0
  %v1958 = vadd.f32 %v1863, %v1945
  %v1959 = vadd.f32 %v1864, %v1950
  %v1960 = vadd.f32 %v1865, %v1955
  %v1961 = vld [vmem:[#allocation5] sm:$0xff]
  %v1962 = vld [vmem:[#allocation5 + $0x8] sm:$0xff]
  %v1963 = vld [vmem:[#allocation5 + $0x10] sm:$0x3f]
  %v1964 = vxor.u32 %v1958, 2147483648
  %v1965 = vxor.u32 %v1959, 2147483648
  %v1966 = vxor.u32 %v1960, 2147483648
  %v1967 = vmul.f32 %v1964, 1.442695
  %v1968 = vpow.pop %v1967
  %v1969 = vmul.f32 %v1965, 1.442695
  %v1970 = vpow.pop %v1969
  %v1971 = vmul.f32 %v1966, 1.442695
  %v1972 = vpow.pop %v1971
  %v1973 = vadd.f32 %v1968, 1.0
  %v1974 = vadd.f32 %v1970, 1.0
  %v1975 = vadd.f32 %v1972, 1.0
  %v1976 = vrcp.pop %v1973
  %v1977 = vmul.f32 1.0, %v1976
  %v1978 = vrcp.pop %v1974
  %v1979 = vmul.f32 1.0, %v1978
  %v1980 = vrcp.pop %v1975
  %v1981 = vmul.f32 1.0, %v1980
  %v1982 = vtanh.pop %v1958
  %v1983 = vtanh.pop %v1959
  %v1984 = vtanh.pop %v1960
  %1988 = vrot.lane.b32.xlu0 %v1961, 8
  %v1989 = vpop.permute.xlu0 %1988
  %1990 = vrot.lane.b32.xlu0 %v1962, 8
  %v1991 = vpop.permute.xlu0 %1990
  %1992 = vrot.lane.b32.xlu0 %v1963, 8
  %v1993 = vpop.permute.xlu0 %1992
  %v1997 = vmul.f32 %v1977, %v1989
  %v1998 = vmul.f32 %v1979, %v1991
  %v1999 = vmul.f32 %v1981, %v1993
  %2003 = vrot.lane.b32.xlu0 %v1982, 112
  %v2004 = vpop.permute.xlu0 %2003
  %2005 = vrot.lane.b32.xlu0 %v1983, 112
  %v2006 = vpop.permute.xlu0 %2005
  %2007 = vrot.lane.b32.xlu0 %v1984, 112
  %v2008 = vpop.permute.xlu0 %2007
  %v2012 = vmul.f32 %v1977, %v2004
  %v2013 = vmul.f32 %v1979, %v2006
  %v2014 = vmul.f32 %v1981, %v2008
  %2018 = vrot.lane.b32.xlu0 %v2012, 8
  %v2019 = vpop.permute.xlu0 %2018
  %2020 = vrot.lane.b32.xlu0 %v2013, 8
  %v2021 = vpop.permute.xlu0 %2020
  %2022 = vrot.lane.b32.xlu0 %v2014, 8
  %v2023 = vpop.permute.xlu0 %2022
  %v2027 = vadd.f32 %v1997, %v2019
  %v2028 = vadd.f32 %v1998, %v2021
  %v2029 = vadd.f32 %v1999, %v2023
  %v2030 = vtanh.pop %v2027
  %v2031 = vtanh.pop %v2028
  %v2032 = vtanh.pop %v2029
  %2036 = vrot.lane.b32.xlu0 %v2030, 16
  %v2037 = vpop.permute.xlu0 %2036
  %2038 = vrot.lane.b32.xlu0 %v2031, 16
  %v2039 = vpop.permute.xlu0 %2038
  %2040 = vrot.lane.b32.xlu0 %v2032, 16
  %v2041 = vpop.permute.xlu0 %2040
  %v2045 = vmul.f32 %v1977, %v2037
  %v2046 = vmul.f32 %v1979, %v2039
  %v2047 = vmul.f32 %v1981, %v2041
  %2048 = vrot.lane.b32.xlu0 %v1866, 24
  %v2049 = vpop.permute.xlu0 %2048
  %2050 = vrot.lane.b32.xlu0 %v1867, 24
  %v2051 = vpop.permute.xlu0 %2050
  %2052 = vrot.lane.b32.xlu0 %v1868, 24
  %v2053 = vpop.permute.xlu0 %2052
  %v2057 = vsel %vm243, %v2045, %v2049
  %v2058 = vsel %vm244, %v2046, %v2051
  %v2059 = vsel %vm245, %v2047, %v2053
  %v2060 = vsel %vm243, %v2027, %v1989
  %v2061 = vsel %vm244, %v2028, %v1991
  %v2062 = vsel %vm245, %v2029, %v1993
  %v2063 = vsel %vm243, %v2045, 0.0
  %v2064 = vsel %vm244, %v2046, 0.0
  %v2065 = vsel %vm245, %v2047, 0.0
  %2069 = vrot.lane.b32.xlu0 %v2057, 104
  %v2070 = vpop.permute.xlu0 %2069
  %2071 = vrot.lane.b32.xlu0 %v2058, 104
  %v2072 = vpop.permute.xlu0 %2071
  %2073 = vrot.lane.b32.xlu0 %v2059, 104
  %v2074 = vpop.permute.xlu0 %2073
  %2078 = vst.msk [vmem:[#allocation4] sm:$0xff] %vm24, %v2070
  %2079 = vst.msk [vmem:[#allocation4 + $0x8] sm:$0xff] %vm24, %v2072
  %2080 = vst.msk [vmem:[#allocation4 + $0x10] sm:$0x3f] %vm27, %v2074
  %2084 = vrot.lane.b32.xlu0 %v2060, 120
  %v2085 = vpop.permute.xlu0 %2084
  %2086 = vrot.lane.b32.xlu0 %v2061, 120
  %v2087 = vpop.permute.xlu0 %2086
  %2088 = vrot.lane.b32.xlu0 %v2062, 120
  %v2089 = vpop.permute.xlu0 %2088
  %2093 = vst.msk [vmem:[#allocation5] sm:$0xff] %vm24, %v2085
  %2094 = vst.msk [vmem:[#allocation5 + $0x8] sm:$0xff] %vm24, %v2087
  %2095 = vst.msk [vmem:[#allocation5 + $0x10] sm:$0x3f] %vm27, %v2089
  %2099 = vrot.lane.b32.xlu0 %v2063, 104
  %v2100 = vpop.permute.xlu0 %2099
  %2101 = vrot.lane.b32.xlu0 %v2064, 104
  %v2102 = vpop.permute.xlu0 %2101
  %2103 = vrot.lane.b32.xlu0 %v2065, 104
  %v2104 = vpop.permute.xlu0 %2103
  %2108 = vst.msk [vmem:[%s6] sm:$0xff] %vm24, %v2100
  %2109 = vst.msk [vmem:[%s6 + $0x8] sm:$0xff] %vm24, %v2102
  %2110 = vst.msk [vmem:[%s6 + $0x10] sm:$0x3f] %vm27, %v2104
  %v2111 = vld [vmem:[#allocation2] sm:$0xff]
  %v2112 = vld [vmem:[#allocation2 + $0x8] sm:$0xff]
  %v2113 = vld [vmem:[#allocation2 + $0x10] sm:$0x3f]
  %2114 = vst.msk [vmem:[%s7] sm:$0xff] %vm24, %v2111
  %2115 = vst.msk [vmem:[%s7 + $0x8] sm:$0xff] %vm24, %v2112
  %2116 = vst.msk [vmem:[%s7 + $0x10] sm:$0x3f] %vm27, %v2113
  %v2117 = vld [vmem:[#allocation4] sm:$0xff]
  %v2118 = vld [vmem:[#allocation4 + $0x8] sm:$0xff]
  %v2119 = vld [vmem:[#allocation4 + $0x10] sm:$0x3f]
  %2120 = vst.msk [vmem:[%s8] sm:$0xff] %vm24, %v2117
  %2121 = vst.msk [vmem:[%s8 + $0x8] sm:$0xff] %vm24, %v2118
  %2122 = vst.msk [vmem:[%s8 + $0x10] sm:$0x3f] %vm27, %v2119
  // Predicated region
  $region22: #{tpu_custom_call.1} parent=0 // pred_check
    _
  $region23: #{tpu_custom_call.1} parent=0 // pred_check_branch
    %2124 = sbr.rel (0) target = $region25
  $region24: #{tpu_custom_call.1} parent=0 // pred_region
    _
  $region25: #{tpu_custom_call.1} parent=0 // pred_fallthru
    _
  // Predicated region
  $region26: #{tpu_custom_call.1} parent=0 // pred_check
    _
  $region27: #{tpu_custom_call.1} parent=0 // pred_check_branch
    %2126 = sbr.rel (0) target = $region29
  $region28: #{tpu_custom_call.1} parent=0 // pred_region
    _
  $region29: #{tpu_custom_call.1} parent=0 // pred_fallthru
    _
  // Predicated region
  $region30: #{tpu_custom_call.1} parent=0 // pred_check
    _
  $region31: #{tpu_custom_call.1} parent=0 // pred_check_branch
    %2128 = sbr.rel (0) target = $region33
  $region32: #{tpu_custom_call.1} parent=0 // pred_region
    _
  $region33: #{tpu_custom_call.1} parent=0 // pred_fallthru
    _
  // Predicated region
  $region34: #{tpu_custom_call.1} parent=0 // pred_check
    _
  $region35: #{tpu_custom_call.1} parent=0 // pred_check_branch
    %2130 = sbr.rel (0) target = $region37
  $region36: #{tpu_custom_call.1} parent=0 // pred_region
    _
  $region37: #{tpu_custom_call.1} parent=0 // pred_fallthru
    _
  // Predicated region
  $region38: #{tpu_custom_call.1} parent=0 // pred_check
    _
  $region39: #{tpu_custom_call.1} parent=0 // pred_check_branch
    %2132 = sbr.rel (0) target = $region41
  $region40: #{tpu_custom_call.1} parent=0 // pred_region
    _
  $region41: #{tpu_custom_call.1} parent=0 // pred_fallthru
    _
  // Predicated region
  $region42: #{tpu_custom_call.1} parent=0 // pred_check
    _
  $region43: #{tpu_custom_call.1} parent=0 // pred_check_branch
    %2134 = sbr.rel (0) target = $region45
  $region44: #{tpu_custom_call.1} parent=0 // pred_region
    _
  $region45: #{tpu_custom_call.1} parent=0 // pred_fallthru
    _
  // Predicated region
  $region46: #{tpu_custom_call.1} parent=0 // pred_check
    _
  $region47: #{tpu_custom_call.1} parent=0 // pred_check_branch
    %2136 = sbr.rel (0) target = $region49
  $region48: #{tpu_custom_call.1} parent=0 // pred_region
    _
  $region49: #{tpu_custom_call.1} parent=0 // pred_fallthru
    _
  // Predicated region
  $region50: #{tpu_custom_call.1} parent=0 // pred_check
    _
  $region51: #{tpu_custom_call.1} parent=0 // pred_check_branch
    %2138 = sbr.rel (0) target = $region53
  $region52: #{tpu_custom_call.1} parent=0 // pred_region
    _
  $region53: #{tpu_custom_call.1} parent=0 // pred_fallthru
    _

</llo_original>
